<compile_context>
chip_gen: v7x
topology: tpu7x:2x2x1
jax: 0.10.0
libtpu: 0.0.40
codegen_flags: <defaults>
</compile_context>

<pallas_src>
import jax
import jax.numpy as jnp
import numpy as np
from jax.experimental import pallas as pl
from jax.experimental.pallas import tpu as pltpu


# ----------------------------- Pallas kernel ------------------------------ #

def attnpool_kernel(x_ref, pos0_ref, poss_ref, hsum_ref, hexp_ref,
                    wq_ref, bq_ref, wk_ref, bk_ref, wv_ref, bv_ref,
                    wc_ref, bc_ref, o_ref):
    """AttentionPool2d forward for a tile of TB batch elements."""
    f32 = jnp.float32
    bf16 = jnp.bfloat16

    x = x_ref[...].astype(f32)                              # (TB, HW, C)
    TB, HW, C = x.shape
    nH = hsum_ref.shape[1]

    # token 0 = mean over spatial tokens (+ pos[0]); spatial tokens + pos[1:].
    t0 = jnp.mean(x, axis=1) + pos0_ref[...]                # (TB, C)
    ts = x + poss_ref[...][None, :, :]                      # (TB, HW, C)

    t0_b = t0.astype(bf16)                                  # (TB, C)
    ts_b = ts.reshape(TB * HW, C).astype(bf16)              # (TB*HW, C)

    # Projections: bf16 MXU matmuls, f32 accumulation.  The 1/sqrt(head_dim)
    # scale is folded into wq/bq in the wrapper.  Mean-token q/k/v for all TB
    # samples are each one (TB, C) @ (C, C) matmul (no M=1 matmuls).
    q = jnp.dot(t0_b, wq_ref[...], preferred_element_type=f32) + bq_ref[...]   # (TB, C)
    k0 = jnp.dot(t0_b, wk_ref[...], preferred_element_type=f32) + bk_ref[...]  # (TB, C)
    v0 = jnp.dot(t0_b, wv_ref[...], preferred_element_type=f32) + bv_ref[...]  # (TB, C)
    ks = (jnp.dot(ts_b, wk_ref[...], preferred_element_type=f32)
          + bk_ref[...]).reshape(TB, HW, C)                 # (TB, HW, C)
    vs = (jnp.dot(ts_b, wv_ref[...], preferred_element_type=f32)
          + bv_ref[...]).reshape(TB, HW, C)                 # (TB, HW, C)

    hsum = hsum_ref[...]                                    # (C, nH) bf16
    hexp = hexp_ref[...]                                    # (nH, C) bf16

    # Per-sample, per-head scores of the single query vs. all keys.
    s0 = jnp.dot((k0 * q).astype(bf16), hsum,
                 preferred_element_type=f32)                # (TB, nH)
    ss = jnp.dot((ks * q[:, None, :]).reshape(TB * HW, C).astype(bf16), hsum,
                 preferred_element_type=f32).reshape(TB, HW, nH)

    # Stable softmax over {mean token} U {spatial tokens}, per sample & head.
    m = jnp.maximum(s0, jnp.max(ss, axis=1))                # (TB, nH)
    e0 = jnp.exp(s0 - m)                                    # (TB, nH)
    es = jnp.exp(ss - m[:, None, :])                        # (TB, HW, nH)
    denom = e0 + jnp.sum(es, axis=1)                        # (TB, nH)
    inv = pl.reciprocal(denom, approx=True)                 # (TB, nH)

    # Weighted values, recombined over heads via the head-expand matmul.
    w0 = jnp.dot((e0 * inv).astype(bf16), hexp,
                 preferred_element_type=f32)                # (TB, C)
    wsp = jnp.dot((es * inv[:, None, :]).reshape(TB * HW, nH).astype(bf16),
                  hexp, preferred_element_type=f32).reshape(TB, HW, C)
    attn = w0 * v0 + jnp.sum(wsp * vs, axis=1)              # (TB, C)

    # Output projection (c_proj).
    out = jnp.dot(attn.astype(bf16), wc_ref[...],
                  preferred_element_type=f32) + bc_ref[...]  # (TB, Dout)
    o_ref[...] = out.astype(o_ref.dtype)


# ------------------------------ JAX wrapper -------------------------------- #

def attention_pool2d(x, params, num_heads):
    """x: (B, C, H, W) -> (B, output_dim). TB samples per grid step."""
    B, C, H, W = x.shape
    HW = H * W
    Dout = params["wc"].shape[0]
    assert C % num_heads == 0
    Hd = C // num_heads
    scale = float(Hd) ** -0.5

    # (B, C, H, W) -> (B, HW, C) in bf16.  The transpose fuses with the cast in
    # XLA, so this is a single HBM pass (half the activation bytes of f32).
    x_bsd = jnp.transpose(x.reshape(B, C, HW), (0, 2, 1)).astype(jnp.bfloat16)

    pos = params["pos"].astype(jnp.float32)
    pos0 = pos[:1]                                          # (1, C)
    poss = pos[1:]                                          # (HW, C)

    # Head-sum (C, nH) / head-expand (nH, C) 0/1 matrices, hoisted out of the
    # kernel and stored as bf16 constants.
    cid = np.arange(C) // Hd
    hsum_np = (cid[:, None] == np.arange(num_heads)[None, :]).astype(np.float32)
    hsum = jnp.asarray(hsum_np, jnp.bfloat16)               # (C, nH)
    hexp = jnp.asarray(hsum_np.T, jnp.bfloat16)             # (nH, C)

    # Pre-transposed bf16 weights (kernel computes x @ Wt); fold the attention
    # scale into the Q projection weight/bias.
    wq_t = (params["wq"].T * scale).astype(jnp.bfloat16)    # (C, C)
    wk_t = params["wk"].T.astype(jnp.bfloat16)              # (C, C)
    wv_t = params["wv"].T.astype(jnp.bfloat16)              # (C, C)
    wc_t = params["wc"].T.astype(jnp.bfloat16)              # (C, Dout)
    bq = (params["bq"] * scale).reshape(1, C).astype(jnp.float32)
    bk = params["bk"].reshape(1, C).astype(jnp.float32)
    bv = params["bv"].reshape(1, C).astype(jnp.float32)
    bc = params["bc"].reshape(1, Dout).astype(jnp.float32)

    consts = (pos0, poss, hsum, hexp, wq_t, bq, wk_t, bk, wv_t, bv, wc_t, bc)
    const_bytes = sum(int(a.size) * a.dtype.itemsize for a in consts)

    # Generation-aware VMEM budget (v7x: 64 MiB/TC; v5e/v6e: 128 MiB).
    try:
        vmem_cap = int(pltpu.get_tpu_info().vmem_capacity_bytes)
    except Exception:
        vmem_cap = 64 << 20
    budget = vmem_cap - (8 << 20)

    def footprint(tb):
        x_blk = tb * HW * C * 2                 # bf16 input block (double-buffered)
        o_blk = tb * Dout * 4                   # f32 output block (double-buffered)
        tmp = 10 * tb * HW * C * 4              # live f32 intermediates (estimate)
        return const_bytes + 2 * x_blk + 2 * o_blk + tmp + (2 << 20)

    # Batch-tile size: aim for TB*HW >= 256 to fill the MXU M dimension while
    # staying inside the VMEM budget.  TB must divide B.
    divisors = [d for d in range(1, B + 1) if B % d == 0]
    target = max(1, pl.cdiv(256, HW))
    tb = max([d for d in divisors if d <= target] or [1])
    while tb > 1 and footprint(tb) > budget:
        tb = max([d for d in divisors if d < tb] or [1])

    vmem_limit = int(max(min(footprint(tb), budget), 16 << 20))

    x_spec = pl.BlockSpec((tb, HW, C), lambda b: (b, 0, 0))
    # Constant (grid-invariant) inputs: single-buffered, resident in VMEM.
    const_specs = [
        pl.BlockSpec(a.shape, lambda b: (0, 0), pipeline_mode=pl.Buffered(1))
        for a in consts
    ]

    out = pl.pallas_call(
        attnpool_kernel,
        out_shape=jax.ShapeDtypeStruct((B, Dout), x.dtype),
        grid=(B // tb,),
        in_specs=[x_spec] + const_specs,
        out_specs=pl.BlockSpec((tb, Dout), lambda b: (b, 0)),
        compiler_params=pltpu.CompilerParams(
            dimension_semantics=("parallel",),
            vmem_limit_bytes=vmem_limit),
    )(x_bsd, *consts)
    return out


# --------------------------- pure-JAX reference ----------------------------- #

def ref_attention_pool2d(x, p, num_heads):
    B, C, H, W = x.shape
    HW = H * W
    xs = jnp.transpose(x.reshape(B, C, HW), (2, 0, 1))       # (HW, B, C)
    xs = jnp.concatenate([xs.mean(axis=0, keepdims=True), xs], axis=0)  # (S,B,C)
    xs = xs + p["pos"][:, None, :]
    S = xs.shape[0]
    Hd = C // num_heads

    q = xs[:1] @ p["wq"].T + p["bq"]                         # (1, B, C)
    k = xs @ p["wk"].T + p["bk"]                             # (S, B, C)
    v = xs @ p["wv"].T + p["bv"]
    qh = q.reshape(1, B, num_heads, Hd).transpose(1, 2, 0, 3) * (Hd ** -0.5)
    kh = k.reshape(S, B, num_heads, Hd).transpose(1, 2, 0, 3)
    vh = v.reshape(S, B, num_heads, Hd).transpose(1, 2, 0, 3)
    s = jnp.einsum("bhqd,bhkd->bhqk", qh, kh)
    pm = jax.nn.softmax(s, axis=-1)
    o = jnp.einsum("bhqk,bhkd->bhqd", pm, vh)                # (B, nH, 1, Hd)
    o = o.transpose(2, 0, 1, 3).reshape(1, B, C)
    out = o @ p["wc"].T + p["bc"]                            # (1, B, Dout)
    return out[0]                                            # (B, Dout)


# --------------------------------- main ------------------------------------- #

if __name__ == "__main__":
    B, C, H, NH, DOUT = 2, 32, 8, 4, 64       # spacial_dim=8, embed_dim=32
    S = H * H + 1

    key = jax.random.PRNGKey(0)
    ks = jax.random.split(key, 10)
    rnd = lambda k, shape, s: jax.random.normal(k, shape, jnp.float32) * s

    x = jax.random.normal(ks[0], (B, C, H, H), jnp.float32)
    params = dict(
        pos=rnd(ks[1], (S, C), C ** -0.5),
        wq=rnd(ks[2], (C, C), C ** -0.5), bq=rnd(ks[3], (C,), 0.02),
        wk=rnd(ks[4], (C, C), C ** -0.5), bk=rnd(ks[5], (C,), 0.02),
        wv=rnd(ks[6], (C, C), C ** -0.5), bv=rnd(ks[7], (C,), 0.02),
        wc=rnd(ks[8], (DOUT, C), C ** -0.5), bc=rnd(ks[9], (DOUT,), 0.02),
    )

    out = attention_pool2d(x, params, NH)
    out = jax.block_until_ready(out)

    ref = ref_attention_pool2d(x, params, NH)
    assert out.shape == (B, DOUT)
    np.testing.assert_allclose(np.asarray(out), np.asarray(ref),
                               atol=3e-2, rtol=3e-2)
    print("KERNEL_OK")
</pallas_src>

<mosaic_0001>
module attributes {stable_mosaic.version = 11 : i64} {
  func.func @attnpool_kernel(%arg0: i32, %arg1: memref<2x64x32xbf16, #tpu.memory_space<vmem>>, %arg2: memref<1x32xf32, #tpu.memory_space<vmem>>, %arg3: memref<64x32xf32, #tpu.memory_space<vmem>>, %arg4: memref<32x4xbf16, #tpu.memory_space<vmem>>, %arg5: memref<4x32xbf16, #tpu.memory_space<vmem>>, %arg6: memref<32x32xbf16, #tpu.memory_space<vmem>>, %arg7: memref<1x32xf32, #tpu.memory_space<vmem>>, %arg8: memref<32x32xbf16, #tpu.memory_space<vmem>>, %arg9: memref<1x32xf32, #tpu.memory_space<vmem>>, %arg10: memref<32x32xbf16, #tpu.memory_space<vmem>>, %arg11: memref<1x32xf32, #tpu.memory_space<vmem>>, %arg12: memref<32x64xbf16, #tpu.memory_space<vmem>>, %arg13: memref<1x64xf32, #tpu.memory_space<vmem>>, %arg14: memref<2x64xf32, #tpu.memory_space<vmem>>) attributes {dimension_semantics = [#tpu.dimension_semantics<parallel>], iteration_bounds = array<i64: 1>, scalar_prefetch = 0 : i64, scratch_operands = 0 : i64, tpu.core_type = #tpu.core_type<tc>, window_params = [{transform_indices = @transform_0, window_bounds = array<i64: 2, 64, 32>}, {pipeline_mode = #tpu.pipeline_mode<synchronous>, transform_indices = @transform_1, window_bounds = array<i64: 1, 32>}, {pipeline_mode = #tpu.pipeline_mode<synchronous>, transform_indices = @transform_2, window_bounds = array<i64: 64, 32>}, {pipeline_mode = #tpu.pipeline_mode<synchronous>, transform_indices = @transform_3, window_bounds = array<i64: 32, 4>}, {pipeline_mode = #tpu.pipeline_mode<synchronous>, transform_indices = @transform_4, window_bounds = array<i64: 4, 32>}, {pipeline_mode = #tpu.pipeline_mode<synchronous>, transform_indices = @transform_5, window_bounds = array<i64: 32, 32>}, {pipeline_mode = #tpu.pipeline_mode<synchronous>, transform_indices = @transform_6, window_bounds = array<i64: 1, 32>}, {pipeline_mode = #tpu.pipeline_mode<synchronous>, transform_indices = @transform_7, window_bounds = array<i64: 32, 32>}, {pipeline_mode = #tpu.pipeline_mode<synchronous>, transform_indices = @transform_8, window_bounds = array<i64: 1, 32>}, {pipeline_mode = #tpu.pipeline_mode<synchronous>, transform_indices = @transform_9, window_bounds = array<i64: 32, 32>}, {pipeline_mode = #tpu.pipeline_mode<synchronous>, transform_indices = @transform_10, window_bounds = array<i64: 1, 32>}, {pipeline_mode = #tpu.pipeline_mode<synchronous>, transform_indices = @transform_11, window_bounds = array<i64: 32, 64>}, {pipeline_mode = #tpu.pipeline_mode<synchronous>, transform_indices = @transform_12, window_bounds = array<i64: 1, 64>}, {transform_indices = @transform_13, window_bounds = array<i64: 2, 64>}]} {
    %c0 = arith.constant 0 : index
    %c0_0 = arith.constant 0 : index
    %c0_1 = arith.constant 0 : index
    %0 = vector.load %arg1[%c0, %c0_0, %c0_1] : memref<2x64x32xbf16, #tpu.memory_space<vmem>>, vector<2x64x32xbf16>
    %1 = arith.extf %0 : vector<2x64x32xbf16> to vector<2x64x32xf32>
    %cst = arith.constant dense<0.000000e+00> : vector<2x32xf32>
    %2 = vector.multi_reduction <add>, %1, %cst [1] : vector<2x64x32xf32> to vector<2x32xf32>
    %cst_2 = arith.constant 6.400000e+01 : f32
    %3 = vector.broadcast %cst_2 : f32 to vector<2x32xf32>
    %4 = arith.divf %2, %3 : vector<2x32xf32>
    %c0_3 = arith.constant 0 : index
    %c0_4 = arith.constant 0 : index
    %5 = vector.load %arg2[%c0_3, %c0_4] : memref<1x32xf32, #tpu.memory_space<vmem>>, vector<1x32xf32>
    %6 = vector.broadcast %5 : vector<1x32xf32> to vector<2x32xf32>
    %7 = arith.addf %4, %6 : vector<2x32xf32>
    %c0_5 = arith.constant 0 : index
    %c0_6 = arith.constant 0 : index
    %8 = vector.load %arg3[%c0_5, %c0_6] : memref<64x32xf32, #tpu.memory_space<vmem>>, vector<64x32xf32>
    %9 = vector.shape_cast %8 : vector<64x32xf32> to vector<1x64x32xf32>
    %10 = vector.broadcast %9 : vector<1x64x32xf32> to vector<2x64x32xf32>
    %11 = arith.addf %1, %10 : vector<2x64x32xf32>
    %12 = arith.truncf %7 : vector<2x32xf32> to vector<2x32xbf16>
    %13 = vector.shape_cast %11 : vector<2x64x32xf32> to vector<128x32xf32>
    %14 = arith.truncf %13 : vector<128x32xf32> to vector<128x32xbf16>
    %c0_7 = arith.constant 0 : index
    %c0_8 = arith.constant 0 : index
    %15 = vector.load %arg6[%c0_7, %c0_8] : memref<32x32xbf16, #tpu.memory_space<vmem>>, vector<32x32xbf16>
    %cst_9 = arith.constant dense<0.000000e+00> : vector<2x32xf32>
    %16 = tpu.matmul %12, %15, %cst_9 {dimension_numbers = #tpu.dot_dimension_numbers<[1], [0], [0], [1], [0, 0, 1, 1], [], []>} : vector<2x32xbf16>, vector<32x32xbf16>, vector<2x32xf32> -> vector<2x32xf32>
    %c0_10 = arith.constant 0 : index
    %c0_11 = arith.constant 0 : index
    %17 = vector.load %arg7[%c0_10, %c0_11] : memref<1x32xf32, #tpu.memory_space<vmem>>, vector<1x32xf32>
    %18 = vector.broadcast %17 : vector<1x32xf32> to vector<2x32xf32>
    %19 = arith.addf %16, %18 : vector<2x32xf32>
    %c0_12 = arith.constant 0 : index
    %c0_13 = arith.constant 0 : index
    %20 = vector.load %arg8[%c0_12, %c0_13] : memref<32x32xbf16, #tpu.memory_space<vmem>>, vector<32x32xbf16>
    %cst_14 = arith.constant dense<0.000000e+00> : vector<2x32xf32>
    %21 = tpu.matmul %12, %20, %cst_14 {dimension_numbers = #tpu.dot_dimension_numbers<[1], [0], [0], [1], [0, 0, 1, 1], [], []>} : vector<2x32xbf16>, vector<32x32xbf16>, vector<2x32xf32> -> vector<2x32xf32>
    %c0_15 = arith.constant 0 : index
    %c0_16 = arith.constant 0 : index
    %22 = vector.load %arg9[%c0_15, %c0_16] : memref<1x32xf32, #tpu.memory_space<vmem>>, vector<1x32xf32>
    %23 = vector.broadcast %22 : vector<1x32xf32> to vector<2x32xf32>
    %24 = arith.addf %21, %23 : vector<2x32xf32>
    %c0_17 = arith.constant 0 : index
    %c0_18 = arith.constant 0 : index
    %25 = vector.load %arg10[%c0_17, %c0_18] : memref<32x32xbf16, #tpu.memory_space<vmem>>, vector<32x32xbf16>
    %cst_19 = arith.constant dense<0.000000e+00> : vector<2x32xf32>
    %26 = tpu.matmul %12, %25, %cst_19 {dimension_numbers = #tpu.dot_dimension_numbers<[1], [0], [0], [1], [0, 0, 1, 1], [], []>} : vector<2x32xbf16>, vector<32x32xbf16>, vector<2x32xf32> -> vector<2x32xf32>
    %c0_20 = arith.constant 0 : index
    %c0_21 = arith.constant 0 : index
    %27 = vector.load %arg11[%c0_20, %c0_21] : memref<1x32xf32, #tpu.memory_space<vmem>>, vector<1x32xf32>
    %28 = vector.broadcast %27 : vector<1x32xf32> to vector<2x32xf32>
    %29 = arith.addf %26, %28 : vector<2x32xf32>
    %c0_22 = arith.constant 0 : index
    %c0_23 = arith.constant 0 : index
    %30 = vector.load %arg8[%c0_22, %c0_23] : memref<32x32xbf16, #tpu.memory_space<vmem>>, vector<32x32xbf16>
    %cst_24 = arith.constant dense<0.000000e+00> : vector<128x32xf32>
    %31 = tpu.matmul %14, %30, %cst_24 {dimension_numbers = #tpu.dot_dimension_numbers<[1], [0], [0], [1], [0, 0, 1, 1], [], []>} : vector<128x32xbf16>, vector<32x32xbf16>, vector<128x32xf32> -> vector<128x32xf32>
    %c0_25 = arith.constant 0 : index
    %c0_26 = arith.constant 0 : index
    %32 = vector.load %arg9[%c0_25, %c0_26] : memref<1x32xf32, #tpu.memory_space<vmem>>, vector<1x32xf32>
    %33 = vector.broadcast %32 : vector<1x32xf32> to vector<128x32xf32>
    %34 = arith.addf %31, %33 : vector<128x32xf32>
    %35 = vector.shape_cast %34 : vector<128x32xf32> to vector<2x64x32xf32>
    %c0_27 = arith.constant 0 : index
    %c0_28 = arith.constant 0 : index
    %36 = vector.load %arg10[%c0_27, %c0_28] : memref<32x32xbf16, #tpu.memory_space<vmem>>, vector<32x32xbf16>
    %cst_29 = arith.constant dense<0.000000e+00> : vector<128x32xf32>
    %37 = tpu.matmul %14, %36, %cst_29 {dimension_numbers = #tpu.dot_dimension_numbers<[1], [0], [0], [1], [0, 0, 1, 1], [], []>} : vector<128x32xbf16>, vector<32x32xbf16>, vector<128x32xf32> -> vector<128x32xf32>
    %c0_30 = arith.constant 0 : index
    %c0_31 = arith.constant 0 : index
    %38 = vector.load %arg11[%c0_30, %c0_31] : memref<1x32xf32, #tpu.memory_space<vmem>>, vector<1x32xf32>
    %39 = vector.broadcast %38 : vector<1x32xf32> to vector<128x32xf32>
    %40 = arith.addf %37, %39 : vector<128x32xf32>
    %41 = vector.shape_cast %40 : vector<128x32xf32> to vector<2x64x32xf32>
    %c0_32 = arith.constant 0 : index
    %c0_33 = arith.constant 0 : index
    %42 = vector.load %arg4[%c0_32, %c0_33] : memref<32x4xbf16, #tpu.memory_space<vmem>>, vector<32x4xbf16>
    %c0_34 = arith.constant 0 : index
    %c0_35 = arith.constant 0 : index
    %43 = vector.load %arg5[%c0_34, %c0_35] : memref<4x32xbf16, #tpu.memory_space<vmem>>, vector<4x32xbf16>
    %44 = arith.mulf %24, %19 : vector<2x32xf32>
    %45 = arith.truncf %44 : vector<2x32xf32> to vector<2x32xbf16>
    %cst_36 = arith.constant dense<0.000000e+00> : vector<2x4xf32>
    %46 = tpu.matmul %45, %42, %cst_36 {dimension_numbers = #tpu.dot_dimension_numbers<[1], [0], [0], [1], [0, 0, 1, 1], [], []>} : vector<2x32xbf16>, vector<32x4xbf16>, vector<2x4xf32> -> vector<2x4xf32>
    %47 = vector.shape_cast %19 : vector<2x32xf32> to vector<2x1x32xf32>
    %48 = vector.broadcast %47 : vector<2x1x32xf32> to vector<2x64x32xf32>
    %49 = arith.mulf %35, %48 : vector<2x64x32xf32>
    %50 = vector.shape_cast %49 : vector<2x64x32xf32> to vector<128x32xf32>
    %51 = arith.truncf %50 : vector<128x32xf32> to vector<128x32xbf16>
    %cst_37 = arith.constant dense<0.000000e+00> : vector<128x4xf32>
    %52 = tpu.matmul %51, %42, %cst_37 {dimension_numbers = #tpu.dot_dimension_numbers<[1], [0], [0], [1], [0, 0, 1, 1], [], []>} : vector<128x32xbf16>, vector<32x4xbf16>, vector<128x4xf32> -> vector<128x4xf32>
    %53 = vector.shape_cast %52 : vector<128x4xf32> to vector<2x64x4xf32>
    %cst_38 = arith.constant dense<0xFF800000> : vector<2x4xf32>
    %54 = vector.multi_reduction <maximumf>, %53, %cst_38 [1] : vector<2x64x4xf32> to vector<2x4xf32>
    %55 = arith.maximumf %46, %54 : vector<2x4xf32>
    %56 = arith.subf %46, %55 : vector<2x4xf32>
    %57 = math.exp %56 : vector<2x4xf32>
    %58 = vector.shape_cast %55 : vector<2x4xf32> to vector<2x1x4xf32>
    %59 = vector.broadcast %58 : vector<2x1x4xf32> to vector<2x64x4xf32>
    %60 = arith.subf %53, %59 : vector<2x64x4xf32>
    %61 = math.exp %60 : vector<2x64x4xf32>
    %cst_39 = arith.constant dense<0.000000e+00> : vector<2x4xf32>
    %62 = vector.multi_reduction <add>, %61, %cst_39 [1] : vector<2x64x4xf32> to vector<2x4xf32>
    %63 = arith.addf %57, %62 : vector<2x4xf32>
    %64 = tpu.reciprocal %63 {approx = true} : vector<2x4xf32> -> vector<2x4xf32>
    %65 = arith.mulf %57, %64 : vector<2x4xf32>
    %66 = arith.truncf %65 : vector<2x4xf32> to vector<2x4xbf16>
    %cst_40 = arith.constant dense<0.000000e+00> : vector<2x32xf32>
    %67 = tpu.matmul %66, %43, %cst_40 {dimension_numbers = #tpu.dot_dimension_numbers<[1], [0], [0], [1], [0, 0, 1, 1], [], []>} : vector<2x4xbf16>, vector<4x32xbf16>, vector<2x32xf32> -> vector<2x32xf32>
    %68 = vector.shape_cast %64 : vector<2x4xf32> to vector<2x1x4xf32>
    %69 = vector.broadcast %68 : vector<2x1x4xf32> to vector<2x64x4xf32>
    %70 = arith.mulf %61, %69 : vector<2x64x4xf32>
    %71 = vector.shape_cast %70 : vector<2x64x4xf32> to vector<128x4xf32>
    %72 = arith.truncf %71 : vector<128x4xf32> to vector<128x4xbf16>
    %cst_41 = arith.constant dense<0.000000e+00> : vector<128x32xf32>
    %73 = tpu.matmul %72, %43, %cst_41 {dimension_numbers = #tpu.dot_dimension_numbers<[1], [0], [0], [1], [0, 0, 1, 1], [], []>} : vector<128x4xbf16>, vector<4x32xbf16>, vector<128x32xf32> -> vector<128x32xf32>
    %74 = vector.shape_cast %73 : vector<128x32xf32> to vector<2x64x32xf32>
    %75 = arith.mulf %67, %29 : vector<2x32xf32>
    %76 = arith.mulf %74, %41 : vector<2x64x32xf32>
    %cst_42 = arith.constant dense<0.000000e+00> : vector<2x32xf32>
    %77 = vector.multi_reduction <add>, %76, %cst_42 [1] : vector<2x64x32xf32> to vector<2x32xf32>
    %78 = arith.addf %75, %77 : vector<2x32xf32>
    %79 = arith.truncf %78 : vector<2x32xf32> to vector<2x32xbf16>
    %c0_43 = arith.constant 0 : index
    %c0_44 = arith.constant 0 : index
    %80 = vector.load %arg12[%c0_43, %c0_44] : memref<32x64xbf16, #tpu.memory_space<vmem>>, vector<32x64xbf16>
    %cst_45 = arith.constant dense<0.000000e+00> : vector<2x64xf32>
    %81 = tpu.matmul %79, %80, %cst_45 {dimension_numbers = #tpu.dot_dimension_numbers<[1], [0], [0], [1], [0, 0, 1, 1], [], []>} : vector<2x32xbf16>, vector<32x64xbf16>, vector<2x64xf32> -> vector<2x64xf32>
    %c0_46 = arith.constant 0 : index
    %c0_47 = arith.constant 0 : index
    %82 = vector.load %arg13[%c0_46, %c0_47] : memref<1x64xf32, #tpu.memory_space<vmem>>, vector<1x64xf32>
    %83 = vector.broadcast %82 : vector<1x64xf32> to vector<2x64xf32>
    %84 = arith.addf %81, %83 : vector<2x64xf32>
    %c0_48 = arith.constant 0 : index
    %c0_49 = arith.constant 0 : index
    %85 = vector.load %arg14[%c0_48, %c0_49] : memref<2x64xf32, #tpu.memory_space<vmem>>, vector<2x64xf32>
    tpu.vector_store %arg14[%c0_48, %c0_49], %84 {strides = array<i32>} : memref<2x64xf32, #tpu.memory_space<vmem>>, vector<2x64xf32>,
    return
  }
  func.func @transform_0(%arg0: i32) -> (i32, i32, i32) {
    %c0_i32 = arith.constant 0 : i32
    %c0_i32_0 = arith.constant 0 : i32
    %c0_i32_1 = arith.constant 0 : i32
    return %arg0, %c0_i32, %c0_i32_0 : i32, i32, i32
  }
  func.func @transform_1(%arg0: i32) -> (i32, i32) {
    %c0_i32 = arith.constant 0 : i32
    %c0_i32_0 = arith.constant 0 : i32
    %c0_i32_1 = arith.constant 0 : i32
    return %c0_i32, %c0_i32_0 : i32, i32
  }
  func.func @transform_2(%arg0: i32) -> (i32, i32) {
    %c0_i32 = arith.constant 0 : i32
    %c0_i32_0 = arith.constant 0 : i32
    %c0_i32_1 = arith.constant 0 : i32
    return %c0_i32, %c0_i32_0 : i32, i32
  }
  func.func @transform_3(%arg0: i32) -> (i32, i32) {
    %c0_i32 = arith.constant 0 : i32
    %c0_i32_0 = arith.constant 0 : i32
    %c0_i32_1 = arith.constant 0 : i32
    return %c0_i32, %c0_i32_0 : i32, i32
  }
  func.func @transform_4(%arg0: i32) -> (i32, i32) {
    %c0_i32 = arith.constant 0 : i32
    %c0_i32_0 = arith.constant 0 : i32
    %c0_i32_1 = arith.constant 0 : i32
    return %c0_i32, %c0_i32_0 : i32, i32
  }
  func.func @transform_5(%arg0: i32) -> (i32, i32) {
    %c0_i32 = arith.constant 0 : i32
    %c0_i32_0 = arith.constant 0 : i32
    %c0_i32_1 = arith.constant 0 : i32
    return %c0_i32, %c0_i32_0 : i32, i32
  }
  func.func @transform_6(%arg0: i32) -> (i32, i32) {
    %c0_i32 = arith.constant 0 : i32
    %c0_i32_0 = arith.constant 0 : i32
    %c0_i32_1 = arith.constant 0 : i32
    return %c0_i32, %c0_i32_0 : i32, i32
  }
  func.func @transform_7(%arg0: i32) -> (i32, i32) {
    %c0_i32 = arith.constant 0 : i32
    %c0_i32_0 = arith.constant 0 : i32
    %c0_i32_1 = arith.constant 0 : i32
    return %c0_i32, %c0_i32_0 : i32, i32
  }
  func.func @transform_8(%arg0: i32) -> (i32, i32) {
    %c0_i32 = arith.constant 0 : i32
    %c0_i32_0 = arith.constant 0 : i32
    %c0_i32_1 = arith.constant 0 : i32
    return %c0_i32, %c0_i32_0 : i32, i32
  }
  func.func @transform_9(%arg0: i32) -> (i32, i32) {
    %c0_i32 = arith.constant 0 : i32
    %c0_i32_0 = arith.constant 0 : i32
    %c0_i32_1 = arith.constant 0 : i32
    return %c0_i32, %c0_i32_0 : i32, i32
  }
  func.func @transform_10(%arg0: i32) -> (i32, i32) {
    %c0_i32 = arith.constant 0 : i32
    %c0_i32_0 = arith.constant 0 : i32
    %c0_i32_1 = arith.constant 0 : i32
    return %c0_i32, %c0_i32_0 : i32, i32
  }
  func.func @transform_11(%arg0: i32) -> (i32, i32) {
    %c0_i32 = arith.constant 0 : i32
    %c0_i32_0 = arith.constant 0 : i32
    %c0_i32_1 = arith.constant 0 : i32
    return %c0_i32, %c0_i32_0 : i32, i32
  }
  func.func @transform_12(%arg0: i32) -> (i32, i32) {
    %c0_i32 = arith.constant 0 : i32
    %c0_i32_0 = arith.constant 0 : i32
    %c0_i32_1 = arith.constant 0 : i32
    return %c0_i32, %c0_i32_0 : i32, i32
  }
  func.func @transform_13(%arg0: i32) -> (i32, i32) {
    %c0_i32 = arith.constant 0 : i32
    %c0_i32_0 = arith.constant 0 : i32
    return %arg0, %c0_i32 : i32, i32
  }
}

</mosaic_0001>

<llo_original>
// kernel: tpu_custom_call.1
$region0: #{tpu_custom_call.1}
  #allocation0 [shape = 'u32[]', space=smem, size = 0x4, offset = 0x4, fixed_abs, tag = 'smem constant byte address 0x4 - core index']
  #allocation1 [shape = 'u32[144,128]{1,0:T(1,128)}', space=vmem, size = 0x12000, scoped, tag = 'internal scratch']
  %s0 = inlined_call_operand.vmem [shape: bf16[2,64,32], index: 0, kind: input, shape index: {}]
  %s1 = inlined_call_operand.vmem [shape: f32[1,32], index: 1, kind: input, shape index: {}]
  %s2 = inlined_call_operand.vmem [shape: f32[64,32], index: 2, kind: input, shape index: {}]
  %s3 = inlined_call_operand.vmem [shape: bf16[32,4], index: 3, kind: input, shape index: {}]
  %s4 = inlined_call_operand.vmem [shape: bf16[4,32], index: 4, kind: input, shape index: {}]
  %s5 = inlined_call_operand.vmem [shape: bf16[32,32], index: 5, kind: input, shape index: {}]
  %s6 = inlined_call_operand.vmem [shape: f32[1,32], index: 6, kind: input, shape index: {}]
  %s7 = inlined_call_operand.vmem [shape: bf16[32,32], index: 7, kind: input, shape index: {}]
  %s8 = inlined_call_operand.vmem [shape: f32[1,32], index: 8, kind: input, shape index: {}]
  %s9 = inlined_call_operand.vmem [shape: bf16[32,32], index: 9, kind: input, shape index: {}]
  %s10 = inlined_call_operand.vmem [shape: f32[1,32], index: 10, kind: input, shape index: {}]
  %s11 = inlined_call_operand.vmem [shape: bf16[32,64], index: 11, kind: input, shape index: {}]
  %s12 = inlined_call_operand.vmem [shape: f32[1,64], index: 12, kind: input, shape index: {}]
  %s13 = inlined_call_operand.hbm [shape: f32[2,64], index: 13, kind: output, shape index: {}]
  %s14 = sld [smem:[#allocation0]]
  $region62: #{tpu_custom_call.1} parent=0
    _
  %s16 = ssub.s32 1, %s14
  %s17 = scalar_select 0, %s16, %s14
  $region1: #{tpu_custom_call.1} parent=0
    #allocation2 [shape = 'u8[1024]{0}', space=vmem, size = 0x400, scoped, tag = 'output window, operand 0, single buffered']
    #allocation3 [shape = 's32[1]{0}', space=sflag, size = 0x4, scoped, tag = 'scoped memory for tpu_custom_call.1']
    %18 = vsyncpa [#allocation3], 0
    // Predicated region
    $region2: #{tpu_custom_call.1} parent=1 // pred_check
      _
    $region3: #{tpu_custom_call.1} parent=1 // pred_check_branch
      %20 = sbr.rel (0) target = $region5
    $region4: #{tpu_custom_call.1} parent=1 // pred_region
      _
    $region5: #{tpu_custom_call.1} parent=1 // pred_fallthru
      _
    // Predicated region
    $region6: #{tpu_custom_call.1} parent=1 // pred_check
      _
    $region7: #{tpu_custom_call.1} parent=1 // pred_check_branch
      %22 = sbr.rel (0) target = $region9
    $region8: #{tpu_custom_call.1} parent=1 // pred_region
      _
    $region9: #{tpu_custom_call.1} parent=1 // pred_fallthru
      _
    // Predicated region
    $region10: #{tpu_custom_call.1} parent=1 // pred_check
      _
    $region11: #{tpu_custom_call.1} parent=1 // pred_check_branch
      %24 = sbr.rel (0) target = $region13
    $region12: #{tpu_custom_call.1} parent=1 // pred_region
      _
    $region13: #{tpu_custom_call.1} parent=1 // pred_fallthru
      _
    // Predicated region
    $region14: #{tpu_custom_call.1} parent=1 // pred_check
      _
    $region15: #{tpu_custom_call.1} parent=1 // pred_check_branch
      %26 = sbr.rel (0) target = $region17
    $region16: #{tpu_custom_call.1} parent=1 // pred_region
      _
    $region17: #{tpu_custom_call.1} parent=1 // pred_fallthru
      _
    // Predicated region
    $region18: #{tpu_custom_call.1} parent=1 // pred_check
      _
    $region19: #{tpu_custom_call.1} parent=1 // pred_check_branch
      %28 = sbr.rel (0) target = $region21
    $region20: #{tpu_custom_call.1} parent=1 // pred_region
      _
    $region21: #{tpu_custom_call.1} parent=1 // pred_fallthru
      _
    // Predicated region
    $region22: #{tpu_custom_call.1} parent=1 // pred_check
      _
    $region23: #{tpu_custom_call.1} parent=1 // pred_check_branch
      %30 = sbr.rel (0) target = $region25
    $region24: #{tpu_custom_call.1} parent=1 // pred_region
      _
    $region25: #{tpu_custom_call.1} parent=1 // pred_fallthru
      _
    // Predicated region
    $region26: #{tpu_custom_call.1} parent=1 // pred_check
      _
    $region27: #{tpu_custom_call.1} parent=1 // pred_check_branch
      %32 = sbr.rel (0) target = $region29
    $region28: #{tpu_custom_call.1} parent=1 // pred_region
      _
    $region29: #{tpu_custom_call.1} parent=1 // pred_fallthru
      _
    // Predicated region
    $region30: #{tpu_custom_call.1} parent=1 // pred_check
      _
    $region31: #{tpu_custom_call.1} parent=1 // pred_check_branch
      %34 = sbr.rel (0) target = $region33
    $region32: #{tpu_custom_call.1} parent=1 // pred_region
      _
    $region33: #{tpu_custom_call.1} parent=1 // pred_fallthru
      _
    // Predicated region
    $region34: #{tpu_custom_call.1} parent=1 // pred_check
      _
    $region35: #{tpu_custom_call.1} parent=1 // pred_check_branch
      %36 = sbr.rel (0) target = $region37
    $region36: #{tpu_custom_call.1} parent=1 // pred_region
      _
    $region37: #{tpu_custom_call.1} parent=1 // pred_fallthru
      _
    // Predicated region
    $region38: #{tpu_custom_call.1} parent=1 // pred_check
      _
    $region39: #{tpu_custom_call.1} parent=1 // pred_check_branch
      %38 = sbr.rel (0) target = $region41
    $region40: #{tpu_custom_call.1} parent=1 // pred_region
      _
    $region41: #{tpu_custom_call.1} parent=1 // pred_fallthru
      _
    // Predicated region
    $region42: #{tpu_custom_call.1} parent=1 // pred_check
      _
    $region43: #{tpu_custom_call.1} parent=1 // pred_check_branch
      %40 = sbr.rel (0) target = $region45
    $region44: #{tpu_custom_call.1} parent=1 // pred_region
      _
    $region45: #{tpu_custom_call.1} parent=1 // pred_fallthru
      _
    // Predicated region
    $region46: #{tpu_custom_call.1} parent=1 // pred_check
      _
    $region47: #{tpu_custom_call.1} parent=1 // pred_check_branch
      %42 = sbr.rel (0) target = $region49
    $region48: #{tpu_custom_call.1} parent=1 // pred_region
      _
    $region49: #{tpu_custom_call.1} parent=1 // pred_fallthru
      _
    // Predicated region
    $region50: #{tpu_custom_call.1} parent=1 // pred_check
      _
    $region51: #{tpu_custom_call.1} parent=1 // pred_check_branch
      %44 = sbr.rel (0) target = $region53
    $region52: #{tpu_custom_call.1} parent=1 // pred_region
      _
    $region53: #{tpu_custom_call.1} parent=1 // pred_fallthru
      _
    %v46 = vld [vmem:[%s0] sm:$0xf]
    %v47 = vld [vmem:[%s0 + $0x4] sm:$0xf]
    %v48 = vld [vmem:[%s0 + $0x8] sm:$0xf]
    %v49 = vld [vmem:[%s0 + $0xc] sm:$0xf]
    %v50 = vld [vmem:[%s0 + $0x10] sm:$0xf]
    %v51 = vld [vmem:[%s0 + $0x14] sm:$0xf]
    %v52 = vld [vmem:[%s0 + $0x18] sm:$0xf]
    %v53 = vld [vmem:[%s0 + $0x1c] sm:$0xf]
    %v54 = vld [vmem:[%s0 + $0x20] sm:$0xf]
    %v55 = vld [vmem:[%s0 + $0x24] sm:$0xf]
    %v56 = vld [vmem:[%s0 + $0x28] sm:$0xf]
    %v57 = vld [vmem:[%s0 + $0x2c] sm:$0xf]
    %v58 = vld [vmem:[%s0 + $0x30] sm:$0xf]
    %v59 = vld [vmem:[%s0 + $0x34] sm:$0xf]
    %v60 = vld [vmem:[%s0 + $0x38] sm:$0xf]
    %v61 = vld [vmem:[%s0 + $0x3c] sm:$0xf]
    %v62 = vunpack.c.l.bf16 %v46
    %v63 = vunpack.c.l.bf16 %v47
    %v64 = vunpack.c.l.bf16 %v48
    %v65 = vunpack.c.l.bf16 %v49
    %v66 = vunpack.c.l.bf16 %v50
    %v67 = vunpack.c.l.bf16 %v51
    %v68 = vunpack.c.l.bf16 %v52
    %v69 = vunpack.c.l.bf16 %v53
    %v70 = vunpack.c.l.bf16 %v54
    %v71 = vunpack.c.l.bf16 %v55
    %v72 = vunpack.c.l.bf16 %v56
    %v73 = vunpack.c.l.bf16 %v57
    %v74 = vunpack.c.l.bf16 %v58
    %v75 = vunpack.c.l.bf16 %v59
    %v76 = vunpack.c.l.bf16 %v60
    %v77 = vunpack.c.l.bf16 %v61
    %vm78 = vcmask 261120
    %v79 = vsel %vm78, %v62, 0.0
    %v80 = vsel %vm78, %v63, 0.0
    %v81 = vadd.f32 %v79, %v80
    %v82 = vsel %vm78, %v64, 0.0
    %v83 = vadd.f32 %v81, %v82
    %v84 = vsel %vm78, %v65, 0.0
    %v85 = vadd.f32 %v83, %v84
    %v86 = vsel %vm78, %v66, 0.0
    %v87 = vadd.f32 %v85, %v86
    %v88 = vsel %vm78, %v67, 0.0
    %v89 = vadd.f32 %v87, %v88
    %v90 = vsel %vm78, %v68, 0.0
    %v91 = vadd.f32 %v89, %v90
    %v92 = vsel %vm78, %v69, 0.0
    %v93 = vadd.f32 %v91, %v92
    %v94 = vrot.slane %v93, 4
    %v95 = vadd.f32 %v93, %v94
    %v96 = vrot.slane %v95, 2
    %v97 = vadd.f32 %v95, %v96
    %v98 = vrot.slane %v97, 1
    %v99 = vadd.f32 %v97, %v98
    %v100 = vsel %vm78, %v70, 0.0
    %v101 = vsel %vm78, %v71, 0.0
    %v102 = vadd.f32 %v100, %v101
    %v103 = vsel %vm78, %v72, 0.0
    %v104 = vadd.f32 %v102, %v103
    %v105 = vsel %vm78, %v73, 0.0
    %v106 = vadd.f32 %v104, %v105
    %v107 = vsel %vm78, %v74, 0.0
    %v108 = vadd.f32 %v106, %v107
    %v109 = vsel %vm78, %v75, 0.0
    %v110 = vadd.f32 %v108, %v109
    %v111 = vsel %vm78, %v76, 0.0
    %v112 = vadd.f32 %v110, %v111
    %v113 = vsel %vm78, %v77, 0.0
    %v114 = vadd.f32 %v112, %v113
    %v115 = vrot.slane %v114, 4
    %v116 = vadd.f32 %v114, %v115
    %v117 = vrot.slane %v116, 2
    %v118 = vadd.f32 %v116, %v117
    %v119 = vrot.slane %v118, 1
    %v120 = vadd.f32 %v118, %v119
    %v121 = vrcp.pop 64.0
    %v122 = vmul.f32 %v99, %v121
    %v123 = vmul.f32 %v120, %v121
    %v124 = vld [vmem:[%s1] sm:$0x1]
    %v126 = vlaneseq
    %v127 = vshrl.u32 %v126, 7
    %v128 = vsub.s32 0, %v127
    %v129 = vrot.slane %v124, %v128
    %v131 = vadd.f32 %v122, %v129
    %v132 = vadd.f32 %v123, %v129
    %v133 = vld [vmem:[%s2] sm:$0xff]
    %v134 = vld [vmem:[%s2 + $0x8] sm:$0xff]
    %v135 = vld [vmem:[%s2 + $0x10] sm:$0xff]
    %v136 = vld [vmem:[%s2 + $0x18] sm:$0xff]
    %v137 = vld [vmem:[%s2 + $0x20] sm:$0xff]
    %v138 = vld [vmem:[%s2 + $0x28] sm:$0xff]
    %v139 = vld [vmem:[%s2 + $0x30] sm:$0xff]
    %v140 = vld [vmem:[%s2 + $0x38] sm:$0xff]
    %v141 = vadd.f32 %v62, %v133
    %v142 = vadd.f32 %v63, %v134
    %v143 = vadd.f32 %v64, %v135
    %v144 = vadd.f32 %v65, %v136
    %v145 = vadd.f32 %v66, %v137
    %v146 = vadd.f32 %v67, %v138
    %v147 = vadd.f32 %v68, %v139
    %v148 = vadd.f32 %v69, %v140
    %v149 = vadd.f32 %v70, %v133
    %v150 = vadd.f32 %v71, %v134
    %v151 = vadd.f32 %v72, %v135
    %v152 = vadd.f32 %v73, %v136
    %v153 = vadd.f32 %v74, %v137
    %v154 = vadd.f32 %v75, %v138
    %v155 = vadd.f32 %v76, %v139
    %v156 = vadd.f32 %v77, %v140
    %v157 = vpack.c.bf16 %v131, %v131
    %v158 = vpack.c.bf16 %v132, %v132
    %v159 = vpack.c.bf16 %v142, %v141
    %v160 = vpack.c.bf16 %v144, %v143
    %v161 = vpack.c.bf16 %v146, %v145
    %v162 = vpack.c.bf16 %v148, %v147
    %v163 = vpack.c.bf16 %v150, %v149
    %v164 = vpack.c.bf16 %v152, %v151
    %v165 = vpack.c.bf16 %v154, %v153
    %v166 = vpack.c.bf16 %v156, %v155
    %v167 = vld [vmem:[%s5] sm:$0xf]
    %v168 = vld [vmem:[%s5 + $0x4] sm:$0xf]
    %v169 = vld [vmem:[%s5 + $0x8] sm:$0xf]
    %v170 = vld [vmem:[%s5 + $0xc] sm:$0xf]
    %v171 = vld [vmem:[%s6] sm:$0x1]
    %v173 = vlaneseq
    %v174 = vshrl.u32 %v173, 7
    %v175 = vsub.s32 0, %v174
    %v176 = vrot.slane %v171, %v175
    %v180 = vunpack.c.l.b16 %v157
    %v181 = vunpack.c.l.b16 %v158
    %v182 = vrot.slane %v181, 7
    %vm183 = vcmask 1041409
    %v184 = vsel %vm183, %v182, %v180
    %v185 = vpack.c.b16 %v184, %v184
    %v190 = vunpack.c.l.b16 %v167
    %v191 = vunpack.c.l.b16 %v168
    %v192 = vunpack.c.l.b16 %v169
    %v193 = vunpack.c.l.b16 %v170
    %v194 = vpack.c.b16 %v191, %v190
    %v195 = vpack.c.b16 %v193, %v192
    %v199 = vsel %vm78, %v185, 0
    %201 = vmatprep.subr.bf16.mxu0 0
    %202 = vmatpush1.bf16.msra.mxu0 %v194
    %203 = vmatprep.subr.bf16.mxu0 0
    %204 = vmatpush1.bf16.msra.mxu0 %v195
    %205 = vmatprep.subr.bf16.mxu0 0
    %206 = vmatpush1.bf16.msra.mxu0 0
    %207 = vmatprep.subr.bf16.mxu0 0
    %208 = vmatpush1.bf16.msra.mxu0 0
    %209 = vmatprep.subr.bf16.mxu0 0
    %210 = vmatpush1.bf16.msra.mxu0 0
    %211 = vmatprep.subr.bf16.mxu0 0
    %212 = vmatpush1.bf16.msra.mxu0 0
    %213 = vmatprep.subr.bf16.mxu0 0
    %214 = vmatpush1.bf16.msra.mxu0 0
    %215 = vmatprep.subr.bf16.mxu0 0
    %216 = vmatpush1.bf16.msra.mxu0 0
    %217 = vmatprep.subr.bf16.mxu0 0
    %218 = vmatpush1.bf16.msra.mxu0 0
    %219 = vmatprep.subr.bf16.mxu0 0
    %220 = vmatpush1.bf16.msra.mxu0 0
    %221 = vmatprep.subr.bf16.mxu0 0
    %222 = vmatpush1.bf16.msra.mxu0 0
    %223 = vmatprep.subr.bf16.mxu0 0
    %224 = vmatpush1.bf16.msra.mxu0 0
    %225 = vmatprep.subr.bf16.mxu0 0
    %226 = vmatpush1.bf16.msra.mxu0 0
    %227 = vmatprep.subr.bf16.mxu0 0
    %228 = vmatpush1.bf16.msra.mxu0 0
    %229 = vmatprep.subr.bf16.mxu0 0
    %230 = vmatpush1.bf16.msra.mxu0 0
    %231 = vmatprep.subr.bf16.mxu0 0
    %232 = vmatpush1.bf16.msra.mxu0 0
    %233 = vmatprep.mubr.bf16.mxu0 0
    %234 = vmatmul.mubr.bf16.gmra.mrb[0].mxu0 %v199
    %v235 = vpop.f32.mrb[0].mxu0
    %v236 = vadd.f32 %v176, %v235
    %v237 = vpop.f32.mrb[0].mxu0
    %v238 = vpop.f32.mrb[0].mxu0
    %v239 = vpop.f32.mrb[0].mxu0
    %240 = vdwg.mxu0
    %v241 = vld [vmem:[%s7] sm:$0xf]
    %v242 = vld [vmem:[%s7 + $0x4] sm:$0xf]
    %v243 = vld [vmem:[%s7 + $0x8] sm:$0xf]
    %v244 = vld [vmem:[%s7 + $0xc] sm:$0xf]
    %v245 = vld [vmem:[%s8] sm:$0x1]
    %v247 = vlaneseq
    %v248 = vshrl.u32 %v247, 7
    %v249 = vsub.s32 0, %v248
    %v250 = vrot.slane %v245, %v249
    %v256 = vunpack.c.l.b16 %v241
    %v257 = vunpack.c.l.b16 %v242
    %v258 = vunpack.c.l.b16 %v243
    %v259 = vunpack.c.l.b16 %v244
    %v260 = vpack.c.b16 %v257, %v256
    %v261 = vpack.c.b16 %v259, %v258
    %264 = vmatprep.subr.bf16.mxu0 0
    %265 = vmatpush1.bf16.msra.mxu0 %v260
    %266 = vmatprep.subr.bf16.mxu0 0
    %267 = vmatpush1.bf16.msra.mxu0 %v261
    %268 = vmatprep.subr.bf16.mxu0 0
    %269 = vmatpush1.bf16.msra.mxu0 0
    %270 = vmatprep.subr.bf16.mxu0 0
    %271 = vmatpush1.bf16.msra.mxu0 0
    %272 = vmatprep.subr.bf16.mxu0 0
    %273 = vmatpush1.bf16.msra.mxu0 0
    %274 = vmatprep.subr.bf16.mxu0 0
    %275 = vmatpush1.bf16.msra.mxu0 0
    %276 = vmatprep.subr.bf16.mxu0 0
    %277 = vmatpush1.bf16.msra.mxu0 0
    %278 = vmatprep.subr.bf16.mxu0 0
    %279 = vmatpush1.bf16.msra.mxu0 0
    %280 = vmatprep.subr.bf16.mxu0 0
    %281 = vmatpush1.bf16.msra.mxu0 0
    %282 = vmatprep.subr.bf16.mxu0 0
    %283 = vmatpush1.bf16.msra.mxu0 0
    %284 = vmatprep.subr.bf16.mxu0 0
    %285 = vmatpush1.bf16.msra.mxu0 0
    %286 = vmatprep.subr.bf16.mxu0 0
    %287 = vmatpush1.bf16.msra.mxu0 0
    %288 = vmatprep.subr.bf16.mxu0 0
    %289 = vmatpush1.bf16.msra.mxu0 0
    %290 = vmatprep.subr.bf16.mxu0 0
    %291 = vmatpush1.bf16.msra.mxu0 0
    %292 = vmatprep.subr.bf16.mxu0 0
    %293 = vmatpush1.bf16.msra.mxu0 0
    %294 = vmatprep.subr.bf16.mxu0 0
    %295 = vmatpush1.bf16.msra.mxu0 0
    %296 = vmatprep.mubr.bf16.mxu0 0
    %297 = vmatmul.mubr.bf16.gmra.mrb[0].mxu0 %v199
    %v298 = vpop.f32.mrb[0].mxu0
    %v299 = vadd.f32 %v250, %v298
    %v300 = vpop.f32.mrb[0].mxu0
    %v301 = vpop.f32.mrb[0].mxu0
    %v302 = vpop.f32.mrb[0].mxu0
    %303 = vdwg.mxu0
    %v304 = vld [vmem:[%s9] sm:$0xf]
    %v305 = vld [vmem:[%s9 + $0x4] sm:$0xf]
    %v306 = vld [vmem:[%s9 + $0x8] sm:$0xf]
    %v307 = vld [vmem:[%s9 + $0xc] sm:$0xf]
    %v308 = vld [vmem:[%s10] sm:$0x1]
    %v310 = vlaneseq
    %v311 = vshrl.u32 %v310, 7
    %v312 = vsub.s32 0, %v311
    %v313 = vrot.slane %v308, %v312
    %v319 = vunpack.c.l.b16 %v304
    %v320 = vunpack.c.l.b16 %v305
    %v321 = vunpack.c.l.b16 %v306
    %v322 = vunpack.c.l.b16 %v307
    %v323 = vpack.c.b16 %v320, %v319
    %v324 = vpack.c.b16 %v322, %v321
    %327 = vmatprep.subr.bf16.mxu0 0
    %328 = vmatpush1.bf16.msra.mxu0 %v323
    %329 = vmatprep.subr.bf16.mxu0 0
    %330 = vmatpush1.bf16.msra.mxu0 %v324
    %331 = vmatprep.subr.bf16.mxu0 0
    %332 = vmatpush1.bf16.msra.mxu0 0
    %333 = vmatprep.subr.bf16.mxu0 0
    %334 = vmatpush1.bf16.msra.mxu0 0
    %335 = vmatprep.subr.bf16.mxu0 0
    %336 = vmatpush1.bf16.msra.mxu0 0
    %337 = vmatprep.subr.bf16.mxu0 0
    %338 = vmatpush1.bf16.msra.mxu0 0
    %339 = vmatprep.subr.bf16.mxu0 0
    %340 = vmatpush1.bf16.msra.mxu0 0
    %341 = vmatprep.subr.bf16.mxu0 0
    %342 = vmatpush1.bf16.msra.mxu0 0
    %343 = vmatprep.subr.bf16.mxu0 0
    %344 = vmatpush1.bf16.msra.mxu0 0
    %345 = vmatprep.subr.bf16.mxu0 0
    %346 = vmatpush1.bf16.msra.mxu0 0
    %347 = vmatprep.subr.bf16.mxu0 0
    %348 = vmatpush1.bf16.msra.mxu0 0
    %349 = vmatprep.subr.bf16.mxu0 0
    %350 = vmatpush1.bf16.msra.mxu0 0
    %351 = vmatprep.subr.bf16.mxu0 0
    %352 = vmatpush1.bf16.msra.mxu0 0
    %353 = vmatprep.subr.bf16.mxu0 0
    %354 = vmatpush1.bf16.msra.mxu0 0
    %355 = vmatprep.subr.bf16.mxu0 0
    %356 = vmatpush1.bf16.msra.mxu0 0
    %357 = vmatprep.subr.bf16.mxu0 0
    %358 = vmatpush1.bf16.msra.mxu0 0
    %359 = vmatprep.mubr.bf16.mxu0 0
    %360 = vmatmul.mubr.bf16.gmra.mrb[0].mxu0 %v199
    %v361 = vpop.f32.mrb[0].mxu0
    %v362 = vadd.f32 %v313, %v361
    %v363 = vpop.f32.mrb[0].mxu0
    %v364 = vpop.f32.mrb[0].mxu0
    %v365 = vpop.f32.mrb[0].mxu0
    %366 = vdwg.mxu0
    %v368 = vsel %vm78, %v159, 0
    %v371 = vsel %vm78, %v160, 0
    %v374 = vsel %vm78, %v161, 0
    %v377 = vsel %vm78, %v162, 0
    %v380 = vsel %vm78, %v163, 0
    %v383 = vsel %vm78, %v164, 0
    %v386 = vsel %vm78, %v165, 0
    %v389 = vsel %vm78, %v166, 0
    %391 = vmatprep.subr.bf16.mxu0 0
    %392 = vmatpush1.bf16.msra.mxu0 %v260
    %393 = vmatprep.subr.bf16.mxu0 0
    %394 = vmatpush1.bf16.msra.mxu0 %v261
    %395 = vmatprep.subr.bf16.mxu0 0
    %396 = vmatpush1.bf16.msra.mxu0 0
    %397 = vmatprep.subr.bf16.mxu0 0
    %398 = vmatpush1.bf16.msra.mxu0 0
    %399 = vmatprep.subr.bf16.mxu0 0
    %400 = vmatpush1.bf16.msra.mxu0 0
    %401 = vmatprep.subr.bf16.mxu0 0
    %402 = vmatpush1.bf16.msra.mxu0 0
    %403 = vmatprep.subr.bf16.mxu0 0
    %404 = vmatpush1.bf16.msra.mxu0 0
    %405 = vmatprep.subr.bf16.mxu0 0
    %406 = vmatpush1.bf16.msra.mxu0 0
    %407 = vmatprep.subr.bf16.mxu0 0
    %408 = vmatpush1.bf16.msra.mxu0 0
    %409 = vmatprep.subr.bf16.mxu0 0
    %410 = vmatpush1.bf16.msra.mxu0 0
    %411 = vmatprep.subr.bf16.mxu0 0
    %412 = vmatpush1.bf16.msra.mxu0 0
    %413 = vmatprep.subr.bf16.mxu0 0
    %414 = vmatpush1.bf16.msra.mxu0 0
    %415 = vmatprep.subr.bf16.mxu0 0
    %416 = vmatpush1.bf16.msra.mxu0 0
    %417 = vmatprep.subr.bf16.mxu0 0
    %418 = vmatpush1.bf16.msra.mxu0 0
    %419 = vmatprep.subr.bf16.mxu0 0
    %420 = vmatpush1.bf16.msra.mxu0 0
    %421 = vmatprep.subr.bf16.mxu0 0
    %422 = vmatpush1.bf16.msra.mxu0 0
    %423 = vmatprep.mubr.bf16.mxu0 0
    %424 = vmatmul.mubr.bf16.gmra.mrb[0].mxu0 %v368
    %v425 = vpop.f32.mrb[0].mxu0
    %v426 = vadd.f32 %v250, %v425
    %v427 = vpop.f32.mrb[0].mxu0
    %v428 = vpop.f32.mrb[0].mxu0
    %v429 = vadd.f32 %v250, %v428
    %v430 = vpop.f32.mrb[0].mxu0
    %431 = vmatprep.mubr.bf16.mxu0 0
    %432 = vmatmul.mubr.bf16.gmra.mrb[0].mxu0 %v371
    %v433 = vpop.f32.mrb[0].mxu0
    %v434 = vadd.f32 %v250, %v433
    %v435 = vpop.f32.mrb[0].mxu0
    %v436 = vpop.f32.mrb[0].mxu0
    %v437 = vadd.f32 %v250, %v436
    %v438 = vpop.f32.mrb[0].mxu0
    %439 = vmatprep.mubr.bf16.mxu0 0
    %440 = vmatmul.mubr.bf16.gmra.mrb[0].mxu0 %v374
    %v441 = vpop.f32.mrb[0].mxu0
    %v442 = vadd.f32 %v250, %v441
    %v443 = vpop.f32.mrb[0].mxu0
    %v444 = vpop.f32.mrb[0].mxu0
    %v445 = vadd.f32 %v250, %v444
    %v446 = vpop.f32.mrb[0].mxu0
    %447 = vmatprep.mubr.bf16.mxu0 0
    %448 = vmatmul.mubr.bf16.gmra.mrb[0].mxu0 %v377
    %v449 = vpop.f32.mrb[0].mxu0
    %v450 = vadd.f32 %v250, %v449
    %v451 = vpop.f32.mrb[0].mxu0
    %v452 = vpop.f32.mrb[0].mxu0
    %v453 = vadd.f32 %v250, %v452
    %v454 = vpop.f32.mrb[0].mxu0
    %455 = vmatprep.mubr.bf16.mxu0 0
    %456 = vmatmul.mubr.bf16.gmra.mrb[0].mxu0 %v380
    %v457 = vpop.f32.mrb[0].mxu0
    %v458 = vadd.f32 %v250, %v457
    %v459 = vpop.f32.mrb[0].mxu0
    %v460 = vpop.f32.mrb[0].mxu0
    %v461 = vadd.f32 %v250, %v460
    %v462 = vpop.f32.mrb[0].mxu0
    %463 = vmatprep.mubr.bf16.mxu0 0
    %464 = vmatmul.mubr.bf16.gmra.mrb[0].mxu0 %v383
    %v465 = vpop.f32.mrb[0].mxu0
    %v466 = vadd.f32 %v250, %v465
    %v467 = vpop.f32.mrb[0].mxu0
    %v468 = vpop.f32.mrb[0].mxu0
    %v469 = vadd.f32 %v250, %v468
    %v470 = vpop.f32.mrb[0].mxu0
    %471 = vmatprep.mubr.bf16.mxu0 0
    %472 = vmatmul.mubr.bf16.gmra.mrb[0].mxu0 %v386
    %v473 = vpop.f32.mrb[0].mxu0
    %v474 = vadd.f32 %v250, %v473
    %v475 = vpop.f32.mrb[0].mxu0
    %v476 = vpop.f32.mrb[0].mxu0
    %v477 = vadd.f32 %v250, %v476
    %v478 = vpop.f32.mrb[0].mxu0
    %479 = vmatprep.mubr.bf16.mxu0 0
    %480 = vmatmul.mubr.bf16.gmra.mrb[0].mxu0 %v389
    %v481 = vpop.f32.mrb[0].mxu0
    %v482 = vadd.f32 %v250, %v481
    %v483 = vpop.f32.mrb[0].mxu0
    %v484 = vpop.f32.mrb[0].mxu0
    %v485 = vadd.f32 %v250, %v484
    %v486 = vpop.f32.mrb[0].mxu0
    %487 = vdwg.mxu0
    %488 = vmatprep.subr.bf16.mxu0 0
    %489 = vmatpush1.bf16.msra.mxu0 %v323
    %490 = vmatprep.subr.bf16.mxu0 0
    %491 = vmatpush1.bf16.msra.mxu0 %v324
    %492 = vmatprep.subr.bf16.mxu0 0
    %493 = vmatpush1.bf16.msra.mxu0 0
    %494 = vmatprep.subr.bf16.mxu0 0
    %495 = vmatpush1.bf16.msra.mxu0 0
    %496 = vmatprep.subr.bf16.mxu0 0
    %497 = vmatpush1.bf16.msra.mxu0 0
    %498 = vmatprep.subr.bf16.mxu0 0
    %499 = vmatpush1.bf16.msra.mxu0 0
    %500 = vmatprep.subr.bf16.mxu0 0
    %501 = vmatpush1.bf16.msra.mxu0 0
    %502 = vmatprep.subr.bf16.mxu0 0
    %503 = vmatpush1.bf16.msra.mxu0 0
    %504 = vmatprep.subr.bf16.mxu0 0
    %505 = vmatpush1.bf16.msra.mxu0 0
    %506 = vmatprep.subr.bf16.mxu0 0
    %507 = vmatpush1.bf16.msra.mxu0 0
    %508 = vmatprep.subr.bf16.mxu0 0
    %509 = vmatpush1.bf16.msra.mxu0 0
    %510 = vmatprep.subr.bf16.mxu0 0
    %511 = vmatpush1.bf16.msra.mxu0 0
    %512 = vmatprep.subr.bf16.mxu0 0
    %513 = vmatpush1.bf16.msra.mxu0 0
    %514 = vmatprep.subr.bf16.mxu0 0
    %515 = vmatpush1.bf16.msra.mxu0 0
    %516 = vmatprep.subr.bf16.mxu0 0
    %517 = vmatpush1.bf16.msra.mxu0 0
    %518 = vmatprep.subr.bf16.mxu0 0
    %519 = vmatpush1.bf16.msra.mxu0 0
    %520 = vmatprep.mubr.bf16.mxu0 0
    %521 = vmatmul.mubr.bf16.gmra.mrb[0].mxu0 %v368
    %v522 = vpop.f32.mrb[0].mxu0
    %v523 = vadd.f32 %v313, %v522
    %v524 = vpop.f32.mrb[0].mxu0
    %v525 = vpop.f32.mrb[0].mxu0
    %v526 = vadd.f32 %v313, %v525
    %v527 = vpop.f32.mrb[0].mxu0
    %528 = vmatprep.mubr.bf16.mxu0 0
    %529 = vmatmul.mubr.bf16.gmra.mrb[0].mxu0 %v371
    %v530 = vpop.f32.mrb[0].mxu0
    %v531 = vadd.f32 %v313, %v530
    %v532 = vpop.f32.mrb[0].mxu0
    %v533 = vpop.f32.mrb[0].mxu0
    %v534 = vadd.f32 %v313, %v533
    %v535 = vpop.f32.mrb[0].mxu0
    %536 = vmatprep.mubr.bf16.mxu0 0
    %537 = vmatmul.mubr.bf16.gmra.mrb[0].mxu0 %v374
    %v538 = vpop.f32.mrb[0].mxu0
    %v539 = vadd.f32 %v313, %v538
    %v540 = vpop.f32.mrb[0].mxu0
    %v541 = vpop.f32.mrb[0].mxu0
    %v542 = vadd.f32 %v313, %v541
    %v543 = vpop.f32.mrb[0].mxu0
    %544 = vmatprep.mubr.bf16.mxu0 0
    %545 = vmatmul.mubr.bf16.gmra.mrb[0].mxu0 %v377
    %v546 = vpop.f32.mrb[0].mxu0
    %v547 = vadd.f32 %v313, %v546
    %v548 = vpop.f32.mrb[0].mxu0
    %v549 = vpop.f32.mrb[0].mxu0
    %v550 = vadd.f32 %v313, %v549
    %v551 = vpop.f32.mrb[0].mxu0
    %552 = vmatprep.mubr.bf16.mxu0 0
    %553 = vmatmul.mubr.bf16.gmra.mrb[0].mxu0 %v380
    %v554 = vpop.f32.mrb[0].mxu0
    %v555 = vadd.f32 %v313, %v554
    %v556 = vpop.f32.mrb[0].mxu0
    %v557 = vpop.f32.mrb[0].mxu0
    %v558 = vadd.f32 %v313, %v557
    %v559 = vpop.f32.mrb[0].mxu0
    %560 = vmatprep.mubr.bf16.mxu0 0
    %561 = vmatmul.mubr.bf16.gmra.mrb[0].mxu0 %v383
    %v562 = vpop.f32.mrb[0].mxu0
    %v563 = vadd.f32 %v313, %v562
    %v564 = vpop.f32.mrb[0].mxu0
    %v565 = vpop.f32.mrb[0].mxu0
    %v566 = vadd.f32 %v313, %v565
    %v567 = vpop.f32.mrb[0].mxu0
    %568 = vmatprep.mubr.bf16.mxu0 0
    %569 = vmatmul.mubr.bf16.gmra.mrb[0].mxu0 %v386
    %v570 = vpop.f32.mrb[0].mxu0
    %v571 = vadd.f32 %v313, %v570
    %v572 = vpop.f32.mrb[0].mxu0
    %v573 = vpop.f32.mrb[0].mxu0
    %v574 = vadd.f32 %v313, %v573
    %v575 = vpop.f32.mrb[0].mxu0
    %576 = vmatprep.mubr.bf16.mxu0 0
    %577 = vmatmul.mubr.bf16.gmra.mrb[0].mxu0 %v389
    %v578 = vpop.f32.mrb[0].mxu0
    %v579 = vadd.f32 %v313, %v578
    %v580 = vpop.f32.mrb[0].mxu0
    %v581 = vpop.f32.mrb[0].mxu0
    %v582 = vadd.f32 %v313, %v581
    %v583 = vpop.f32.mrb[0].mxu0
    %584 = vdwg.mxu0
    %v585 = vld [vmem:[%s3] sm:$0xf]
    %v586 = vld [vmem:[%s3 + $0x4] sm:$0xf]
    %v587 = vld [vmem:[%s3 + $0x8] sm:$0xf]
    %v588 = vld [vmem:[%s3 + $0xc] sm:$0xf]
    %v589 = vld [vmem:[%s4] sm:$0x3]
    %v590 = vmul.f32 %v299, %v236
    %v591 = vpack.c.bf16 %v590, %v590
    %v596 = vunpack.c.l.b16 %v585
    %v597 = vunpack.c.l.b16 %v586
    %v598 = vunpack.c.l.b16 %v587
    %v599 = vunpack.c.l.b16 %v588
    %v600 = vpack.c.b16 %v597, %v596
    %v601 = vpack.c.b16 %v599, %v598
    %v605 = vsel %vm78, %v591, 0
    %607 = vmatprep.subr.bf16.mxu0 0
    %608 = vmatpush1.bf16.msra.mxu0 %v600
    %609 = vmatprep.subr.bf16.mxu0 0
    %610 = vmatpush1.bf16.msra.mxu0 %v601
    %611 = vmatprep.subr.bf16.mxu0 0
    %612 = vmatpush1.bf16.msra.mxu0 0
    %613 = vmatprep.subr.bf16.mxu0 0
    %614 = vmatpush1.bf16.msra.mxu0 0
    %615 = vmatprep.subr.bf16.mxu0 0
    %616 = vmatpush1.bf16.msra.mxu0 0
    %617 = vmatprep.subr.bf16.mxu0 0
    %618 = vmatpush1.bf16.msra.mxu0 0
    %619 = vmatprep.subr.bf16.mxu0 0
    %620 = vmatpush1.bf16.msra.mxu0 0
    %621 = vmatprep.subr.bf16.mxu0 0
    %622 = vmatpush1.bf16.msra.mxu0 0
    %623 = vmatprep.subr.bf16.mxu0 0
    %624 = vmatpush1.bf16.msra.mxu0 0
    %625 = vmatprep.subr.bf16.mxu0 0
    %626 = vmatpush1.bf16.msra.mxu0 0
    %627 = vmatprep.subr.bf16.mxu0 0
    %628 = vmatpush1.bf16.msra.mxu0 0
    %629 = vmatprep.subr.bf16.mxu0 0
    %630 = vmatpush1.bf16.msra.mxu0 0
    %631 = vmatprep.subr.bf16.mxu0 0
    %632 = vmatpush1.bf16.msra.mxu0 0
    %633 = vmatprep.subr.bf16.mxu0 0
    %634 = vmatpush1.bf16.msra.mxu0 0
    %635 = vmatprep.subr.bf16.mxu0 0
    %636 = vmatpush1.bf16.msra.mxu0 0
    %637 = vmatprep.subr.bf16.mxu0 0
    %638 = vmatpush1.bf16.msra.mxu0 0
    %639 = vmatprep.mubr.bf16.mxu0 0
    %640 = vmatmul.mubr.bf16.gmra.mrb[0].mxu0 %v605
    %v641 = vpop.f32.mrb[0].mxu0
    %v642 = vadd.f32 0.0, %v641
    %v643 = vpop.f32.mrb[0].mxu0
    %v644 = vpop.f32.mrb[0].mxu0
    %v645 = vpop.f32.mrb[0].mxu0
    %646 = vdwg.mxu0
    %v649 = vunpack.c.l.s4 1966171168
    %v650 = vunpack.c.0.s8 %v649
    %v651 = vlaneseq
    %v652 = vshrl.u32 %v651, 7
    %v653 = vsub.s32 %v650, %v652
    %v654 = vrot.slane %v236, %v653
    %v655 = vcombine.high %v654, %v654
    %v657 = vunpack.c.l.s4 1966171168
    %v658 = vunpack.c.0.s8 %v657
    %v659 = vlaneseq
    %v660 = vshrl.u32 %v659, 7
    %v661 = vsub.s32 %v658, %v660
    %v662 = vrot.slane %v654, %v661
    %v664 = vunpack.c.l.s4 1966171168
    %v665 = vunpack.c.0.s8 %v664
    %v666 = vlaneseq
    %v667 = vshrl.u32 %v666, 7
    %v668 = vsub.s32 %v665, %v667
    %v669 = vrot.slane %v655, %v668
    %v670 = vlaneseq
    %v671 = vshrl.u32 %v670, 7
    %v672 = vsub.s32 0, %v671
    %v673 = vrot.slane %v662, %v672
    %v674 = vlaneseq
    %v675 = vshrl.u32 %v674, 7
    %v676 = vsub.s32 0, %v675
    %v677 = vrot.slane %v669, %v676
    %v680 = vmul.f32 %v426, %v673
    %v681 = vmul.f32 %v429, %v673
    %v682 = vmul.f32 %v434, %v673
    %v683 = vmul.f32 %v437, %v673
    %v684 = vmul.f32 %v442, %v673
    %v685 = vmul.f32 %v445, %v673
    %v686 = vmul.f32 %v450, %v673
    %v687 = vmul.f32 %v453, %v673
    %v688 = vmul.f32 %v458, %v677
    %v689 = vmul.f32 %v461, %v677
    %v690 = vmul.f32 %v466, %v677
    %v691 = vmul.f32 %v469, %v677
    %v692 = vmul.f32 %v474, %v677
    %v693 = vmul.f32 %v477, %v677
    %v694 = vmul.f32 %v482, %v677
    %v695 = vmul.f32 %v485, %v677
    %v696 = vpack.c.bf16 %v681, %v680
    %v697 = vpack.c.bf16 %v683, %v682
    %v698 = vpack.c.bf16 %v685, %v684
    %v699 = vpack.c.bf16 %v687, %v686
    %v700 = vpack.c.bf16 %v689, %v688
    %v701 = vpack.c.bf16 %v691, %v690
    %v702 = vpack.c.bf16 %v693, %v692
    %v703 = vpack.c.bf16 %v695, %v694
    %v705 = vsel %vm78, %v696, 0
    %v708 = vsel %vm78, %v697, 0
    %v711 = vsel %vm78, %v698, 0
    %v714 = vsel %vm78, %v699, 0
    %v717 = vsel %vm78, %v700, 0
    %v720 = vsel %vm78, %v701, 0
    %v723 = vsel %vm78, %v702, 0
    %v726 = vsel %vm78, %v703, 0
    %728 = vmatprep.subr.bf16.mxu0 0
    %729 = vmatpush1.bf16.msra.mxu0 %v600
    %730 = vmatprep.subr.bf16.mxu0 0
    %731 = vmatpush1.bf16.msra.mxu0 %v601
    %732 = vmatprep.subr.bf16.mxu0 0
    %733 = vmatpush1.bf16.msra.mxu0 0
    %734 = vmatprep.subr.bf16.mxu0 0
    %735 = vmatpush1.bf16.msra.mxu0 0
    %736 = vmatprep.subr.bf16.mxu0 0
    %737 = vmatpush1.bf16.msra.mxu0 0
    %738 = vmatprep.subr.bf16.mxu0 0
    %739 = vmatpush1.bf16.msra.mxu0 0
    %740 = vmatprep.subr.bf16.mxu0 0
    %741 = vmatpush1.bf16.msra.mxu0 0
    %742 = vmatprep.subr.bf16.mxu0 0
    %743 = vmatpush1.bf16.msra.mxu0 0
    %744 = vmatprep.subr.bf16.mxu0 0
    %745 = vmatpush1.bf16.msra.mxu0 0
    %746 = vmatprep.subr.bf16.mxu0 0
    %747 = vmatpush1.bf16.msra.mxu0 0
    %748 = vmatprep.subr.bf16.mxu0 0
    %749 = vmatpush1.bf16.msra.mxu0 0
    %750 = vmatprep.subr.bf16.mxu0 0
    %751 = vmatpush1.bf16.msra.mxu0 0
    %752 = vmatprep.subr.bf16.mxu0 0
    %753 = vmatpush1.bf16.msra.mxu0 0
    %754 = vmatprep.subr.bf16.mxu0 0
    %755 = vmatpush1.bf16.msra.mxu0 0
    %756 = vmatprep.subr.bf16.mxu0 0
    %757 = vmatpush1.bf16.msra.mxu0 0
    %758 = vmatprep.subr.bf16.mxu0 0
    %759 = vmatpush1.bf16.msra.mxu0 0
    %760 = vmatprep.mubr.bf16.mxu0 0
    %761 = vmatmul.mubr.bf16.gmra.mrb[0].mxu0 %v705
    %v762 = vpop.f32.mrb[0].mxu0
    %v763 = vadd.f32 0.0, %v762
    %v764 = vpop.f32.mrb[0].mxu0
    %v765 = vpop.f32.mrb[0].mxu0
    %v766 = vadd.f32 0.0, %v765
    %v767 = vpop.f32.mrb[0].mxu0
    %768 = vmatprep.mubr.bf16.mxu0 0
    %769 = vmatmul.mubr.bf16.gmra.mrb[0].mxu0 %v708
    %v770 = vpop.f32.mrb[0].mxu0
    %v771 = vadd.f32 0.0, %v770
    %v772 = vpop.f32.mrb[0].mxu0
    %v773 = vpop.f32.mrb[0].mxu0
    %v774 = vadd.f32 0.0, %v773
    %v775 = vpop.f32.mrb[0].mxu0
    %776 = vmatprep.mubr.bf16.mxu0 0
    %777 = vmatmul.mubr.bf16.gmra.mrb[0].mxu0 %v711
    %v778 = vpop.f32.mrb[0].mxu0
    %v779 = vadd.f32 0.0, %v778
    %v780 = vpop.f32.mrb[0].mxu0
    %v781 = vpop.f32.mrb[0].mxu0
    %v782 = vadd.f32 0.0, %v781
    %v783 = vpop.f32.mrb[0].mxu0
    %784 = vmatprep.mubr.bf16.mxu0 0
    %785 = vmatmul.mubr.bf16.gmra.mrb[0].mxu0 %v714
    %v786 = vpop.f32.mrb[0].mxu0
    %v787 = vadd.f32 0.0, %v786
    %v788 = vpop.f32.mrb[0].mxu0
    %v789 = vpop.f32.mrb[0].mxu0
    %v790 = vadd.f32 0.0, %v789
    %v791 = vpop.f32.mrb[0].mxu0
    %792 = vmatprep.mubr.bf16.mxu0 0
    %793 = vmatmul.mubr.bf16.gmra.mrb[0].mxu0 %v717
    %v794 = vpop.f32.mrb[0].mxu0
    %v795 = vadd.f32 0.0, %v794
    %v796 = vpop.f32.mrb[0].mxu0
    %v797 = vpop.f32.mrb[0].mxu0
    %v798 = vadd.f32 0.0, %v797
    %v799 = vpop.f32.mrb[0].mxu0
    %800 = vmatprep.mubr.bf16.mxu0 0
    %801 = vmatmul.mubr.bf16.gmra.mrb[0].mxu0 %v720
    %v802 = vpop.f32.mrb[0].mxu0
    %v803 = vadd.f32 0.0, %v802
    %v804 = vpop.f32.mrb[0].mxu0
    %v805 = vpop.f32.mrb[0].mxu0
    %v806 = vadd.f32 0.0, %v805
    %v807 = vpop.f32.mrb[0].mxu0
    %808 = vmatprep.mubr.bf16.mxu0 0
    %809 = vmatmul.mubr.bf16.gmra.mrb[0].mxu0 %v723
    %v810 = vpop.f32.mrb[0].mxu0
    %v811 = vadd.f32 0.0, %v810
    %v812 = vpop.f32.mrb[0].mxu0
    %v813 = vpop.f32.mrb[0].mxu0
    %v814 = vadd.f32 0.0, %v813
    %v815 = vpop.f32.mrb[0].mxu0
    %816 = vmatprep.mubr.bf16.mxu0 0
    %817 = vmatmul.mubr.bf16.gmra.mrb[0].mxu0 %v726
    %v818 = vpop.f32.mrb[0].mxu0
    %v819 = vadd.f32 0.0, %v818
    %v820 = vpop.f32.mrb[0].mxu0
    %v821 = vpop.f32.mrb[0].mxu0
    %v822 = vadd.f32 0.0, %v821
    %v823 = vpop.f32.mrb[0].mxu0
    %824 = vdwg.mxu0
    %vm825 = vcmask 31744
    %v826 = vsel %vm825, %v763, -inf
    %v827 = vsel %vm825, %v766, -inf
    %v828 = vsel %vm825, %v771, -inf
    %v829 = vmax.f32 %v826, %v828
    %v830 = vsel %vm825, %v774, -inf
    %v831 = vmax.f32 %v827, %v830
    %v832 = vsel %vm825, %v779, -inf
    %v833 = vmax.f32 %v829, %v832
    %v834 = vsel %vm825, %v782, -inf
    %v835 = vmax.f32 %v831, %v834
    %v836 = vsel %vm825, %v787, -inf
    %v837 = vmax.f32 %v833, %v836
    %v838 = vsel %vm825, %v790, -inf
    %v839 = vmax.f32 %v835, %v838
    %v840 = vmax.f32 %v837, %v839
    %v841 = vrot.slane %v840, 4
    %v842 = vmax.f32 %v840, %v841
    %v843 = vrot.slane %v842, 2
    %v844 = vmax.f32 %v842, %v843
    %v845 = vrot.slane %v844, 1
    %v846 = vmax.f32 %v844, %v845
    %v847 = vsel %vm825, %v795, -inf
    %v848 = vsel %vm825, %v798, -inf
    %v849 = vsel %vm825, %v803, -inf
    %v850 = vmax.f32 %v847, %v849
    %v851 = vsel %vm825, %v806, -inf
    %v852 = vmax.f32 %v848, %v851
    %v853 = vsel %vm825, %v811, -inf
    %v854 = vmax.f32 %v850, %v853
    %v855 = vsel %vm825, %v814, -inf
    %v856 = vmax.f32 %v852, %v855
    %v857 = vsel %vm825, %v819, -inf
    %v858 = vmax.f32 %v854, %v857
    %v859 = vsel %vm825, %v822, -inf
    %v860 = vmax.f32 %v856, %v859
    %v861 = vmax.f32 %v858, %v860
    %v862 = vrot.slane %v861, 4
    %v863 = vmax.f32 %v861, %v862
    %v864 = vrot.slane %v863, 2
    %v865 = vmax.f32 %v863, %v864
    %v866 = vrot.slane %v865, 1
    %v867 = vmax.f32 %v865, %v866
    %v870 = vsel %vm183, %v867, %v846
    %v872 = vmax.f32 %v642, %v870
    %v873 = vsub.f32 %v642, %v872
    %v874 = vmul.f32 %v873, 1.442695
    %v875 = vpow.pop %v874
    %v878 = vunpack.c.l.s4 1966171168
    %v879 = vunpack.c.0.s8 %v878
    %v880 = vlaneseq
    %v881 = vshrl.u32 %v880, 7
    %v882 = vsub.s32 %v879, %v881
    %v883 = vrot.slane %v872, %v882
    %v884 = vcombine.high %v883, %v883
    %v886 = vunpack.c.l.s4 1966171168
    %v887 = vunpack.c.0.s8 %v886
    %v888 = vlaneseq
    %v889 = vshrl.u32 %v888, 7
    %v890 = vsub.s32 %v887, %v889
    %v891 = vrot.slane %v883, %v890
    %v893 = vunpack.c.l.s4 1966171168
    %v894 = vunpack.c.0.s8 %v893
    %v895 = vlaneseq
    %v896 = vshrl.u32 %v895, 7
    %v897 = vsub.s32 %v894, %v896
    %v898 = vrot.slane %v884, %v897
    %v899 = vlaneseq
    %v900 = vshrl.u32 %v899, 7
    %v901 = vsub.s32 0, %v900
    %v902 = vrot.slane %v891, %v901
    %v903 = vlaneseq
    %v904 = vshrl.u32 %v903, 7
    %v905 = vsub.s32 0, %v904
    %v906 = vrot.slane %v898, %v905
    %v909 = vsub.f32 %v763, %v902
    %v910 = vsub.f32 %v766, %v902
    %v911 = vsub.f32 %v771, %v902
    %v912 = vsub.f32 %v774, %v902
    %v913 = vsub.f32 %v779, %v902
    %v914 = vsub.f32 %v782, %v902
    %v915 = vsub.f32 %v787, %v902
    %v916 = vsub.f32 %v790, %v902
    %v917 = vsub.f32 %v795, %v906
    %v918 = vsub.f32 %v798, %v906
    %v919 = vsub.f32 %v803, %v906
    %v920 = vsub.f32 %v806, %v906
    %v921 = vsub.f32 %v811, %v906
    %v922 = vsub.f32 %v814, %v906
    %v923 = vsub.f32 %v819, %v906
    %v924 = vsub.f32 %v822, %v906
    %v925 = vmul.f32 %v909, 1.442695
    %v926 = vpow.pop %v925
    %v927 = vmul.f32 %v910, 1.442695
    %v928 = vpow.pop %v927
    %v929 = vmul.f32 %v911, 1.442695
    %v930 = vpow.pop %v929
    %v931 = vmul.f32 %v912, 1.442695
    %v932 = vpow.pop %v931
    %v933 = vmul.f32 %v913, 1.442695
    %v934 = vpow.pop %v933
    %v935 = vmul.f32 %v914, 1.442695
    %v936 = vpow.pop %v935
    %v937 = vmul.f32 %v915, 1.442695
    %v938 = vpow.pop %v937
    %v939 = vmul.f32 %v916, 1.442695
    %v940 = vpow.pop %v939
    %v941 = vmul.f32 %v917, 1.442695
    %v942 = vpow.pop %v941
    %v943 = vmul.f32 %v918, 1.442695
    %v944 = vpow.pop %v943
    %v945 = vmul.f32 %v919, 1.442695
    %v946 = vpow.pop %v945
    %v947 = vmul.f32 %v920, 1.442695
    %v948 = vpow.pop %v947
    %v949 = vmul.f32 %v921, 1.442695
    %v950 = vpow.pop %v949
    %v951 = vmul.f32 %v922, 1.442695
    %v952 = vpow.pop %v951
    %v953 = vmul.f32 %v923, 1.442695
    %v954 = vpow.pop %v953
    %v955 = vmul.f32 %v924, 1.442695
    %v956 = vpow.pop %v955
    %v957 = vsel %vm825, %v926, 0.0
    %v958 = vsel %vm825, %v928, 0.0
    %v959 = vadd.f32 %v957, %v958
    %v960 = vsel %vm825, %v930, 0.0
    %v961 = vadd.f32 %v959, %v960
    %v962 = vsel %vm825, %v932, 0.0
    %v963 = vadd.f32 %v961, %v962
    %v964 = vsel %vm825, %v934, 0.0
    %v965 = vadd.f32 %v963, %v964
    %v966 = vsel %vm825, %v936, 0.0
    %v967 = vadd.f32 %v965, %v966
    %v968 = vsel %vm825, %v938, 0.0
    %v969 = vadd.f32 %v967, %v968
    %v970 = vsel %vm825, %v940, 0.0
    %v971 = vadd.f32 %v969, %v970
    %v972 = vrot.slane %v971, 4
    %v973 = vadd.f32 %v971, %v972
    %v974 = vrot.slane %v973, 2
    %v975 = vadd.f32 %v973, %v974
    %v976 = vrot.slane %v975, 1
    %v977 = vadd.f32 %v975, %v976
    %v978 = vsel %vm825, %v942, 0.0
    %v979 = vsel %vm825, %v944, 0.0
    %v980 = vadd.f32 %v978, %v979
    %v981 = vsel %vm825, %v946, 0.0
    %v982 = vadd.f32 %v980, %v981
    %v983 = vsel %vm825, %v948, 0.0
    %v984 = vadd.f32 %v982, %v983
    %v985 = vsel %vm825, %v950, 0.0
    %v986 = vadd.f32 %v984, %v985
    %v987 = vsel %vm825, %v952, 0.0
    %v988 = vadd.f32 %v986, %v987
    %v989 = vsel %vm825, %v954, 0.0
    %v990 = vadd.f32 %v988, %v989
    %v991 = vsel %vm825, %v956, 0.0
    %v992 = vadd.f32 %v990, %v991
    %v993 = vrot.slane %v992, 4
    %v994 = vadd.f32 %v992, %v993
    %v995 = vrot.slane %v994, 2
    %v996 = vadd.f32 %v994, %v995
    %v997 = vrot.slane %v996, 1
    %v998 = vadd.f32 %v996, %v997
    %v1001 = vsel %vm183, %v998, %v977
    %v1003 = vadd.f32 %v875, %v1001
    %v1004 = vrcp.pop %v1003
    %v1005 = vmul.f32 %v875, %v1004
    %v1006 = vpack.c.bf16 %v1005, %v1005
    %v1008 = vsel %vm825, %v1006, 0
    %vm1010 = vcmask 1041408
    %v1012 = vsel %vm1010, %v589, 0
    %1014 = vmatprep.subr.bf16.mxu0 0
    %1015 = vmatpush1.bf16.msra.mxu0 %v1012
    %1016 = vmatprep.subr.bf16.mxu0 0
    %1017 = vmatpush1.bf16.msra.mxu0 0
    %1018 = vmatprep.subr.bf16.mxu0 0
    %1019 = vmatpush1.bf16.msra.mxu0 0
    %1020 = vmatprep.subr.bf16.mxu0 0
    %1021 = vmatpush1.bf16.msra.mxu0 0
    %1022 = vmatprep.subr.bf16.mxu0 0
    %1023 = vmatpush1.bf16.msra.mxu0 0
    %1024 = vmatprep.subr.bf16.mxu0 0
    %1025 = vmatpush1.bf16.msra.mxu0 0
    %1026 = vmatprep.subr.bf16.mxu0 0
    %1027 = vmatpush1.bf16.msra.mxu0 0
    %1028 = vmatprep.subr.bf16.mxu0 0
    %1029 = vmatpush1.bf16.msra.mxu0 0
    %1030 = vmatprep.subr.bf16.mxu0 0
    %1031 = vmatpush1.bf16.msra.mxu0 0
    %1032 = vmatprep.subr.bf16.mxu0 0
    %1033 = vmatpush1.bf16.msra.mxu0 0
    %1034 = vmatprep.subr.bf16.mxu0 0
    %1035 = vmatpush1.bf16.msra.mxu0 0
    %1036 = vmatprep.subr.bf16.mxu0 0
    %1037 = vmatpush1.bf16.msra.mxu0 0
    %1038 = vmatprep.subr.bf16.mxu0 0
    %1039 = vmatpush1.bf16.msra.mxu0 0
    %1040 = vmatprep.subr.bf16.mxu0 0
    %1041 = vmatpush1.bf16.msra.mxu0 0
    %1042 = vmatprep.subr.bf16.mxu0 0
    %1043 = vmatpush1.bf16.msra.mxu0 0
    %1044 = vmatprep.subr.bf16.mxu0 0
    %1045 = vmatpush1.bf16.msra.mxu0 0
    %1046 = vmatprep.mubr.bf16.mxu0 0
    %1047 = vmatmul.mubr.bf16.gmra.mrb[0].mxu0 %v1008
    %v1048 = vpop.f32.mrb[0].mxu0
    %v1049 = vadd.f32 0.0, %v1048
    %v1050 = vpop.f32.mrb[0].mxu0
    %v1051 = vpop.f32.mrb[0].mxu0
    %v1052 = vpop.f32.mrb[0].mxu0
    %1053 = vdwg.mxu0
    %v1056 = vunpack.c.l.s4 1966171168
    %v1057 = vunpack.c.0.s8 %v1056
    %v1058 = vlaneseq
    %v1059 = vshrl.u32 %v1058, 7
    %v1060 = vsub.s32 %v1057, %v1059
    %v1061 = vrot.slane %v1004, %v1060
    %v1062 = vcombine.high %v1061, %v1061
    %v1064 = vunpack.c.l.s4 1966171168
    %v1065 = vunpack.c.0.s8 %v1064
    %v1066 = vlaneseq
    %v1067 = vshrl.u32 %v1066, 7
    %v1068 = vsub.s32 %v1065, %v1067
    %v1069 = vrot.slane %v1061, %v1068
    %v1071 = vunpack.c.l.s4 1966171168
    %v1072 = vunpack.c.0.s8 %v1071
    %v1073 = vlaneseq
    %v1074 = vshrl.u32 %v1073, 7
    %v1075 = vsub.s32 %v1072, %v1074
    %v1076 = vrot.slane %v1062, %v1075
    %v1077 = vlaneseq
    %v1078 = vshrl.u32 %v1077, 7
    %v1079 = vsub.s32 0, %v1078
    %v1080 = vrot.slane %v1069, %v1079
    %v1081 = vlaneseq
    %v1082 = vshrl.u32 %v1081, 7
    %v1083 = vsub.s32 0, %v1082
    %v1084 = vrot.slane %v1076, %v1083
    %v1087 = vmul.f32 %v926, %v1080
    %v1088 = vmul.f32 %v928, %v1080
    %v1089 = vmul.f32 %v930, %v1080
    %v1090 = vmul.f32 %v932, %v1080
    %v1091 = vmul.f32 %v934, %v1080
    %v1092 = vmul.f32 %v936, %v1080
    %v1093 = vmul.f32 %v938, %v1080
    %v1094 = vmul.f32 %v940, %v1080
    %v1095 = vmul.f32 %v942, %v1084
    %v1096 = vmul.f32 %v944, %v1084
    %v1097 = vmul.f32 %v946, %v1084
    %v1098 = vmul.f32 %v948, %v1084
    %v1099 = vmul.f32 %v950, %v1084
    %v1100 = vmul.f32 %v952, %v1084
    %v1101 = vmul.f32 %v954, %v1084
    %v1102 = vmul.f32 %v956, %v1084
    %v1103 = vpack.c.bf16 %v1088, %v1087
    %v1104 = vpack.c.bf16 %v1090, %v1089
    %v1105 = vpack.c.bf16 %v1092, %v1091
    %v1106 = vpack.c.bf16 %v1094, %v1093
    %v1107 = vpack.c.bf16 %v1096, %v1095
    %v1108 = vpack.c.bf16 %v1098, %v1097
    %v1109 = vpack.c.bf16 %v1100, %v1099
    %v1110 = vpack.c.bf16 %v1102, %v1101
    %v1112 = vsel %vm825, %v1103, 0
    %v1115 = vsel %vm825, %v1104, 0
    %v1118 = vsel %vm825, %v1105, 0
    %v1121 = vsel %vm825, %v1106, 0
    %v1124 = vsel %vm825, %v1107, 0
    %v1127 = vsel %vm825, %v1108, 0
    %v1130 = vsel %vm825, %v1109, 0
    %v1133 = vsel %vm825, %v1110, 0
    %1135 = vmatprep.subr.bf16.mxu0 0
    %1136 = vmatpush1.bf16.msra.mxu0 %v1012
    %1137 = vmatprep.subr.bf16.mxu0 0
    %1138 = vmatpush1.bf16.msra.mxu0 0
    %1139 = vmatprep.subr.bf16.mxu0 0
    %1140 = vmatpush1.bf16.msra.mxu0 0
    %1141 = vmatprep.subr.bf16.mxu0 0
    %1142 = vmatpush1.bf16.msra.mxu0 0
    %1143 = vmatprep.subr.bf16.mxu0 0
    %1144 = vmatpush1.bf16.msra.mxu0 0
    %1145 = vmatprep.subr.bf16.mxu0 0
    %1146 = vmatpush1.bf16.msra.mxu0 0
    %1147 = vmatprep.subr.bf16.mxu0 0
    %1148 = vmatpush1.bf16.msra.mxu0 0
    %1149 = vmatprep.subr.bf16.mxu0 0
    %1150 = vmatpush1.bf16.msra.mxu0 0
    %1151 = vmatprep.subr.bf16.mxu0 0
    %1152 = vmatpush1.bf16.msra.mxu0 0
    %1153 = vmatprep.subr.bf16.mxu0 0
    %1154 = vmatpush1.bf16.msra.mxu0 0
    %1155 = vmatprep.subr.bf16.mxu0 0
    %1156 = vmatpush1.bf16.msra.mxu0 0
    %1157 = vmatprep.subr.bf16.mxu0 0
    %1158 = vmatpush1.bf16.msra.mxu0 0
    %1159 = vmatprep.subr.bf16.mxu0 0
    %1160 = vmatpush1.bf16.msra.mxu0 0
    %1161 = vmatprep.subr.bf16.mxu0 0
    %1162 = vmatpush1.bf16.msra.mxu0 0
    %1163 = vmatprep.subr.bf16.mxu0 0
    %1164 = vmatpush1.bf16.msra.mxu0 0
    %1165 = vmatprep.subr.bf16.mxu0 0
    %1166 = vmatpush1.bf16.msra.mxu0 0
    %1167 = vmatprep.mubr.bf16.mxu0 0
    %1168 = vmatmul.mubr.bf16.gmra.mrb[0].mxu0 %v1112
    %v1169 = vpop.f32.mrb[0].mxu0
    %v1170 = vadd.f32 0.0, %v1169
    %v1171 = vpop.f32.mrb[0].mxu0
    %v1172 = vpop.f32.mrb[0].mxu0
    %v1173 = vadd.f32 0.0, %v1172
    %v1174 = vpop.f32.mrb[0].mxu0
    %1175 = vmatprep.mubr.bf16.mxu0 0
    %1176 = vmatmul.mubr.bf16.gmra.mrb[0].mxu0 %v1115
    %v1177 = vpop.f32.mrb[0].mxu0
    %v1178 = vadd.f32 0.0, %v1177
    %v1179 = vpop.f32.mrb[0].mxu0
    %v1180 = vpop.f32.mrb[0].mxu0
    %v1181 = vadd.f32 0.0, %v1180
    %v1182 = vpop.f32.mrb[0].mxu0
    %1183 = vmatprep.mubr.bf16.mxu0 0
    %1184 = vmatmul.mubr.bf16.gmra.mrb[0].mxu0 %v1118
    %v1185 = vpop.f32.mrb[0].mxu0
    %v1186 = vadd.f32 0.0, %v1185
    %v1187 = vpop.f32.mrb[0].mxu0
    %v1188 = vpop.f32.mrb[0].mxu0
    %v1189 = vadd.f32 0.0, %v1188
    %v1190 = vpop.f32.mrb[0].mxu0
    %1191 = vmatprep.mubr.bf16.mxu0 0
    %1192 = vmatmul.mubr.bf16.gmra.mrb[0].mxu0 %v1121
    %v1193 = vpop.f32.mrb[0].mxu0
    %v1194 = vadd.f32 0.0, %v1193
    %v1195 = vpop.f32.mrb[0].mxu0
    %v1196 = vpop.f32.mrb[0].mxu0
    %v1197 = vadd.f32 0.0, %v1196
    %v1198 = vpop.f32.mrb[0].mxu0
    %1199 = vmatprep.mubr.bf16.mxu0 0
    %1200 = vmatmul.mubr.bf16.gmra.mrb[0].mxu0 %v1124
    %v1201 = vpop.f32.mrb[0].mxu0
    %v1202 = vadd.f32 0.0, %v1201
    %v1203 = vpop.f32.mrb[0].mxu0
    %v1204 = vpop.f32.mrb[0].mxu0
    %v1205 = vadd.f32 0.0, %v1204
    %v1206 = vpop.f32.mrb[0].mxu0
    %1207 = vmatprep.mubr.bf16.mxu0 0
    %1208 = vmatmul.mubr.bf16.gmra.mrb[0].mxu0 %v1127
    %v1209 = vpop.f32.mrb[0].mxu0
    %v1210 = vadd.f32 0.0, %v1209
    %v1211 = vpop.f32.mrb[0].mxu0
    %v1212 = vpop.f32.mrb[0].mxu0
    %v1213 = vadd.f32 0.0, %v1212
    %v1214 = vpop.f32.mrb[0].mxu0
    %1215 = vmatprep.mubr.bf16.mxu0 0
    %1216 = vmatmul.mubr.bf16.gmra.mrb[0].mxu0 %v1130
    %v1217 = vpop.f32.mrb[0].mxu0
    %v1218 = vadd.f32 0.0, %v1217
    %v1219 = vpop.f32.mrb[0].mxu0
    %v1220 = vpop.f32.mrb[0].mxu0
    %v1221 = vadd.f32 0.0, %v1220
    %v1222 = vpop.f32.mrb[0].mxu0
    %1223 = vmatprep.mubr.bf16.mxu0 0
    %1224 = vmatmul.mubr.bf16.gmra.mrb[0].mxu0 %v1133
    %v1225 = vpop.f32.mrb[0].mxu0
    %v1226 = vadd.f32 0.0, %v1225
    %v1227 = vpop.f32.mrb[0].mxu0
    %v1228 = vpop.f32.mrb[0].mxu0
    %v1229 = vadd.f32 0.0, %v1228
    %v1230 = vpop.f32.mrb[0].mxu0
    %1231 = vdwg.mxu0
    %v1232 = vmul.f32 %v1049, %v362
    %v1233 = vmul.f32 %v1170, %v523
    %v1234 = vmul.f32 %v1173, %v526
    %v1235 = vmul.f32 %v1178, %v531
    %v1236 = vmul.f32 %v1181, %v534
    %v1237 = vmul.f32 %v1186, %v539
    %v1238 = vmul.f32 %v1189, %v542
    %v1239 = vmul.f32 %v1194, %v547
    %v1240 = vmul.f32 %v1197, %v550
    %v1241 = vmul.f32 %v1202, %v555
    %v1242 = vmul.f32 %v1205, %v558
    %v1243 = vmul.f32 %v1210, %v563
    %v1244 = vmul.f32 %v1213, %v566
    %v1245 = vmul.f32 %v1218, %v571
    %v1246 = vmul.f32 %v1221, %v574
    %v1247 = vmul.f32 %v1226, %v579
    %v1248 = vmul.f32 %v1229, %v582
    %v1249 = vsel %vm78, %v1233, 0.0
    %v1250 = vsel %vm78, %v1234, 0.0
    %v1251 = vadd.f32 %v1249, %v1250
    %v1252 = vsel %vm78, %v1235, 0.0
    %v1253 = vadd.f32 %v1251, %v1252
    %v1254 = vsel %vm78, %v1236, 0.0
    %v1255 = vadd.f32 %v1253, %v1254
    %v1256 = vsel %vm78, %v1237, 0.0
    %v1257 = vadd.f32 %v1255, %v1256
    %v1258 = vsel %vm78, %v1238, 0.0
    %v1259 = vadd.f32 %v1257, %v1258
    %v1260 = vsel %vm78, %v1239, 0.0
    %v1261 = vadd.f32 %v1259, %v1260
    %v1262 = vsel %vm78, %v1240, 0.0
    %v1263 = vadd.f32 %v1261, %v1262
    %v1264 = vrot.slane %v1263, 4
    %v1265 = vadd.f32 %v1263, %v1264
    %v1266 = vrot.slane %v1265, 2
    %v1267 = vadd.f32 %v1265, %v1266
    %v1268 = vrot.slane %v1267, 1
    %v1269 = vadd.f32 %v1267, %v1268
    %v1270 = vsel %vm78, %v1241, 0.0
    %v1271 = vsel %vm78, %v1242, 0.0
    %v1272 = vadd.f32 %v1270, %v1271
    %v1273 = vsel %vm78, %v1243, 0.0
    %v1274 = vadd.f32 %v1272, %v1273
    %v1275 = vsel %vm78, %v1244, 0.0
    %v1276 = vadd.f32 %v1274, %v1275
    %v1277 = vsel %vm78, %v1245, 0.0
    %v1278 = vadd.f32 %v1276, %v1277
    %v1279 = vsel %vm78, %v1246, 0.0
    %v1280 = vadd.f32 %v1278, %v1279
    %v1281 = vsel %vm78, %v1247, 0.0
    %v1282 = vadd.f32 %v1280, %v1281
    %v1283 = vsel %vm78, %v1248, 0.0
    %v1284 = vadd.f32 %v1282, %v1283
    %v1285 = vrot.slane %v1284, 4
    %v1286 = vadd.f32 %v1284, %v1285
    %v1287 = vrot.slane %v1286, 2
    %v1288 = vadd.f32 %v1286, %v1287
    %v1289 = vrot.slane %v1288, 1
    %v1290 = vadd.f32 %v1288, %v1289
    %v1293 = vsel %vm183, %v1290, %v1269
    %v1295 = vadd.f32 %v1232, %v1293
    %v1296 = vpack.c.bf16 %v1295, %v1295
    %v1297 = vld [vmem:[%s11] sm:$0xf]
    %v1298 = vld [vmem:[%s11 + $0x4] sm:$0xf]
    %v1299 = vld [vmem:[%s11 + $0x8] sm:$0xf]
    %v1300 = vld [vmem:[%s11 + $0xc] sm:$0xf]
    %v1301 = vld [vmem:[%s12] sm:$0x1]
    %v1303 = vlaneseq
    %v1304 = vshrl.u32 %v1303, 7
    %v1305 = vsub.s32 0, %v1304
    %v1306 = vrot.slane %v1301, %v1305
    %v1312 = vunpack.c.l.b16 %v1297
    %v1313 = vunpack.c.l.b16 %v1298
    %v1314 = vunpack.c.l.b16 %v1299
    %v1315 = vunpack.c.l.b16 %v1300
    %v1316 = vpack.c.b16 %v1313, %v1312
    %v1317 = vpack.c.b16 %v1315, %v1314
    %v1321 = vsel %vm78, %v1296, 0
    %1323 = vmatprep.subr.bf16.mxu0 0
    %1324 = vmatpush1.bf16.msra.mxu0 %v1316
    %1325 = vmatprep.subr.bf16.mxu0 0
    %1326 = vmatpush1.bf16.msra.mxu0 %v1317
    %1327 = vmatprep.subr.bf16.mxu0 0
    %1328 = vmatpush1.bf16.msra.mxu0 0
    %1329 = vmatprep.subr.bf16.mxu0 0
    %1330 = vmatpush1.bf16.msra.mxu0 0
    %1331 = vmatprep.subr.bf16.mxu0 0
    %1332 = vmatpush1.bf16.msra.mxu0 0
    %1333 = vmatprep.subr.bf16.mxu0 0
    %1334 = vmatpush1.bf16.msra.mxu0 0
    %1335 = vmatprep.subr.bf16.mxu0 0
    %1336 = vmatpush1.bf16.msra.mxu0 0
    %1337 = vmatprep.subr.bf16.mxu0 0
    %1338 = vmatpush1.bf16.msra.mxu0 0
    %1339 = vmatprep.subr.bf16.mxu0 0
    %1340 = vmatpush1.bf16.msra.mxu0 0
    %1341 = vmatprep.subr.bf16.mxu0 0
    %1342 = vmatpush1.bf16.msra.mxu0 0
    %1343 = vmatprep.subr.bf16.mxu0 0
    %1344 = vmatpush1.bf16.msra.mxu0 0
    %1345 = vmatprep.subr.bf16.mxu0 0
    %1346 = vmatpush1.bf16.msra.mxu0 0
    %1347 = vmatprep.subr.bf16.mxu0 0
    %1348 = vmatpush1.bf16.msra.mxu0 0
    %1349 = vmatprep.subr.bf16.mxu0 0
    %1350 = vmatpush1.bf16.msra.mxu0 0
    %1351 = vmatprep.subr.bf16.mxu0 0
    %1352 = vmatpush1.bf16.msra.mxu0 0
    %1353 = vmatprep.subr.bf16.mxu0 0
    %1354 = vmatpush1.bf16.msra.mxu0 0
    %1355 = vmatprep.mubr.bf16.mxu0 0
    %1356 = vmatmul.mubr.bf16.gmra.mrb[0].mxu0 %v1321
    %v1357 = vpop.f32.mrb[0].mxu0
    %v1358 = vadd.f32 %v1306, %v1357
    %v1359 = vpop.f32.mrb[0].mxu0
    %v1360 = vpop.f32.mrb[0].mxu0
    %v1361 = vpop.f32.mrb[0].mxu0
    %1362 = vdwg.mxu0
    %vm1363 = vcmask 517120
    %1364 = vst.msk [vmem:[#allocation2] sm:$0x3] %vm1363, %v1358
    // Predicated region
    $region54: #{tpu_custom_call.1} parent=1 // pred_check
      _
    $region55: #{tpu_custom_call.1} parent=1 // pred_check_branch
      %1366 = sbr.rel (0) target = $region57
    $region56: #{tpu_custom_call.1} parent=1 // pred_region
      %s1368 = ssub.s32 32, 32
      %1369 = vsyncadd [#allocation3], %s1368
      %s1371 = sshll.u32 [#allocation2], 4
      %s1372 = int_to_ptr.vmem [resolvable:$true] %s1371
      %1374 = dma.vmem_to_hbm [thread:$0]  %s1372, 32, %s13, [#allocation3]
    $region57: #{tpu_custom_call.1} parent=1 // pred_fallthru
      _
    // Predicated region
    $region58: #{tpu_custom_call.1} parent=1 // pred_check
      _
    $region59: #{tpu_custom_call.1} parent=1 // pred_check_branch
      %1376 = sbr.rel (0) target = $region61
    $region60: #{tpu_custom_call.1} parent=1 // pred_region
      %1377 = dma.done [#allocation3], 32
    $region61: #{tpu_custom_call.1} parent=1 // pred_fallthru
      _
    %1378 = vsyncpa [#allocation3], 1

</llo_original>
